<compile_context>
chip_gen: v5e
topology: v5e:2x2
jax: 0.10.0
libtpu: 0.0.40
codegen_flags: <defaults>
</compile_context>

<pallas_src>
import functools

import jax
import jax.numpy as jnp
from jax.experimental import pallas as pl
from jax.experimental.pallas import tpu as pltpu


def _resolve_group(in_channels, group=32):
    # Mirrors the PyTorch constructor logic.
    if in_channels <= 32:
        group = in_channels // 4
    elif in_channels % group != 0:
        group = 30
    assert in_channels % group == 0
    return group


def _round_up(x, m):
    return ((x + m - 1) // m) * m


# ------------------------------------------------------------------ pass 1 ----------
def _stats_kernel(x_ref, bid_ref, sum_ref, sq_ref, *, n_total, batch_pad):
    """Accumulate per-batch channel sums and sums of squares via a one-hot MXU matmul."""
    tile_n = x_ref.shape[0]

    @pl.when(pl.program_id(0) == 0)
    def _init():
        sum_ref[...] = jnp.zeros_like(sum_ref)
        sq_ref[...] = jnp.zeros_like(sq_ref)

    # Mask ragged-tail rows by *global* row index: OOB block reads are undefined and
    # could contain NaN/Inf, which would poison the matmul accumulation.
    row = (jax.lax.broadcasted_iota(jnp.int32, (tile_n, 1), 0)
           + pl.program_id(0) * tile_n)
    x = jnp.where(row < n_total, x_ref[...].astype(jnp.float32), 0.0)   # (tile_n, C)

    # One-hot (batch_pad, tile_n) built from the lane-major batch ids.  Rows beyond the
    # real batch_size never match, and OOB columns multiply zeroed x rows -> contribute 0.
    bid = bid_ref[...]                                                  # (1, tile_n)
    biota = jax.lax.broadcasted_iota(jnp.int32, (batch_pad, tile_n), 0)
    onehot = (biota == bid).astype(jnp.float32)                         # (batch_pad, tile_n)

    # Segment sums on the (otherwise idle) MXU; one full-block accumulate per output.
    sum_ref[...] += jnp.dot(onehot, x, preferred_element_type=jnp.float32)
    sq_ref[...] += jnp.dot(onehot, x * x, preferred_element_type=jnp.float32)


# ------------------------------------------------------------------ pass 2 ----------
def _norm_kernel(x_ref, bid_ref, scale_ref, shift_ref, o_ref, *, batch_size):
    """out = x * scale[batch_id] + shift[batch_id]  (mean/inv_std/affine pre-folded)."""
    x = x_ref[...].astype(jnp.float32)            # (tile_n, C)
    bid = bid_ref[...]                            # (tile_n, 1) int32
    scale = scale_ref[...]                        # (B, C)  tiny, resident
    shift = shift_ref[...]                        # (B, C)
    sel_scale = jnp.zeros_like(x)
    sel_shift = jnp.zeros_like(x)
    for b in range(batch_size):                   # static unroll; one vselect per batch
        match = bid == b                          # (tile_n, 1) bool
        sel_scale = jnp.where(match, scale[b:b + 1, :], sel_scale)
        sel_shift = jnp.where(match, shift[b:b + 1, :], sel_shift)
    o_ref[...] = (x * sel_scale + sel_shift).astype(o_ref.dtype)


# ------------------------------------------------------------------ wrapper ---------
def dual_octree_group_norm(data, batch_id, batch_size, weights, bias,
                           group=32, eps=1e-5, tile_n=1024):
    """Forward pass of DualOctreeGroupNorm.

    data:     (N, C) float features of the dual-octree nodes.
    batch_id: (N,)   int32 batch index of each node (any order).
    weights:  (1, C) scale parameter.  bias: (1, C) shift parameter.
    """
    N, C = data.shape
    g = _resolve_group(C, group)
    cpg = C // g
    batch_id = batch_id.astype(jnp.int32)

    # Tile size: big (1k rows) for HBM-roofline streaming, clamped for tiny N.  Must be
    # a multiple of 128 so the lane-major (1, tile_n) batch_id block stays legal.
    tile_n = min(tile_n, _round_up(N, 128))
    assert tile_n % 128 == 0
    num_tiles = pl.cdiv(N, tile_n)
    b_pad = _round_up(max(batch_size, 1), 8)        # sublane-aligned accumulator rows
    vmem_limit = 32 * 1024 * 1024                   # few-MiB footprint; safe on v7x 64 MiB

    bid_row = batch_id.reshape(1, N)                # lane-major: pass-1 one-hot build
    bid_col = batch_id.reshape(N, 1)                # sublane-major: pass-2 row select

    # ---- pass 1: per-batch segment statistics (resident accumulators) ---------------
    sums_p, sumsq_p = pl.pallas_call(
        functools.partial(_stats_kernel, n_total=N, batch_pad=b_pad),
        out_shape=(jax.ShapeDtypeStruct((b_pad, C), jnp.float32),
                   jax.ShapeDtypeStruct((b_pad, C), jnp.float32)),
        grid_spec=pltpu.PrefetchScalarGridSpec(
            num_scalar_prefetch=0,
            grid=(num_tiles,),
            in_specs=[
                pl.BlockSpec((tile_n, C), lambda t: (t, 0)),      # x tile
                pl.BlockSpec((1, tile_n), lambda t: (0, t)),      # batch_id (lane-major)
            ],
            out_specs=(
                pl.BlockSpec((b_pad, C), lambda t: (0, 0)),       # resident accumulators
                pl.BlockSpec((b_pad, C), lambda t: (0, 0)),
            ),
        ),
        compiler_params=pltpu.CompilerParams(
            dimension_semantics=("arbitrary",),   # stats carried across tiles
            vmem_limit_bytes=vmem_limit),
    )(data, bid_row)

    # ---- tiny (B, C) epilogue: group-adjusted mean/var -> folded scale/shift --------
    sums = sums_p[:batch_size]
    sumsq = sumsq_p[:batch_size]
    counts = jnp.bincount(batch_id, length=batch_size).astype(jnp.float32)
    counts = counts.reshape(batch_size, 1)                 # (B, 1) node counts

    S = sums.reshape(batch_size, g, cpg).sum(-1)           # (B, G) group sums
    Q = sumsq.reshape(batch_size, g, cpg).sum(-1)          # (B, G) group sums of squares
    d = counts * cpg + eps                                 # reference denominator
    m = S / d                                              # (B, G) group means
    v = (Q - 2.0 * m * S + (counts * cpg) * m * m) / d     # exact expansion of ref var
    inv_std = 1.0 / jnp.sqrt(v + eps)                      # (B, G)
    m_c = jnp.repeat(m, cpg, axis=-1)                      # (B, C)
    inv_c = jnp.repeat(inv_std, cpg, axis=-1)              # (B, C)
    w = weights.reshape(1, C).astype(jnp.float32)
    b_ = bias.reshape(1, C).astype(jnp.float32)
    scale = inv_c * w                                      # (B, C)
    shift = b_ - m_c * scale                               # (B, C)

    # ---- pass 2: normalize (independent tiles -> megacore parallel) -----------------
    out = pl.pallas_call(
        functools.partial(_norm_kernel, batch_size=batch_size),
        out_shape=jax.ShapeDtypeStruct((N, C), data.dtype),
        grid_spec=pltpu.PrefetchScalarGridSpec(
            num_scalar_prefetch=0,
            grid=(num_tiles,),
            in_specs=[
                pl.BlockSpec((tile_n, C), lambda t: (t, 0)),      # x tile
                pl.BlockSpec((tile_n, 1), lambda t: (t, 0)),      # batch_id tile
                pl.BlockSpec((batch_size, C), lambda t: (0, 0)),  # scale (resident)
                pl.BlockSpec((batch_size, C), lambda t: (0, 0)),  # shift (resident)
            ],
            out_specs=pl.BlockSpec((tile_n, C), lambda t: (t, 0)),
        ),
        compiler_params=pltpu.CompilerParams(
            dimension_semantics=("parallel",),
            vmem_limit_bytes=vmem_limit),
    )(data, bid_col, scale, shift)

    return out


# ------------------------------------------------------------------ reference -------
def _adjust_for_group(t, batch_size, group, cpg):
    if cpg > 1:
        t = jnp.repeat(t.reshape(batch_size, group, cpg).sum(-1), cpg, axis=-1)
    return t


def ref_dual_octree_group_norm(data, batch_id, batch_size, weights, bias,
                               group=32, eps=1e-5):
    """Pure-JAX reference mirroring the PyTorch forward (two-pass variance)."""
    N, C = data.shape
    g = _resolve_group(C, group)
    cpg = C // g
    d = data.astype(jnp.float32)

    def seg_sum(t):   # (N, C') -> (B, C'), exact f32 accumulation (no matmul)
        return jnp.stack([jnp.sum(jnp.where(batch_id[:, None] == b, t, 0.0), axis=0)
                          for b in range(batch_size)], axis=0)

    ones = jnp.ones((N, 1), jnp.float32)
    count = seg_sum(ones) * cpg                            # (B, 1)
    inv_count = 1.0 / (count + eps)
    mean = _adjust_for_group(seg_sum(d) * inv_count, batch_size, g, cpg)
    out = d - mean[batch_id]
    var = _adjust_for_group(seg_sum(out * out) * inv_count, batch_size, g, cpg)
    inv_std = 1.0 / jnp.sqrt(var + eps)
    out = out * inv_std[batch_id]
    out = out * weights.reshape(1, C) + bias.reshape(1, C)
    return out.astype(data.dtype)


if __name__ == "__main__":
    key = jax.random.PRNGKey(0)
    kx, kw, kb = jax.random.split(key, 3)

    batch_size = 2
    in_channels = 128                        # -> group = 32, channels_per_group = 4
    node_counts = (1437, 1563)               # uneven octree node counts per batch
    N = sum(node_counts)                     # 3000 -> 3 tiles of 1024 with ragged tail

    batch_id = jnp.concatenate(
        [jnp.full((n,), i, dtype=jnp.int32) for i, n in enumerate(node_counts)])
    data = 1.5 * jax.random.normal(kx, (N, in_channels), dtype=jnp.float32) + 0.3
    weights = 1.0 + 0.1 * jax.random.normal(kw, (1, in_channels), dtype=jnp.float32)
    bias = 0.1 * jax.random.normal(kb, (1, in_channels), dtype=jnp.float32)

    out = dual_octree_group_norm(data, batch_id, batch_size, weights, bias)
    out = jax.block_until_ready(out)

    ref = jax.block_until_ready(
        ref_dual_octree_group_norm(data, batch_id, batch_size, weights, bias))
    assert out.shape == data.shape and out.dtype == data.dtype
    max_err = jnp.max(jnp.abs(out - ref))
    assert jnp.allclose(out, ref, atol=2e-3, rtol=2e-3), f"max abs diff = {max_err}"

    print("KERNEL_OK")
</pallas_src>

<mosaic_0001>
module attributes {stable_mosaic.version = 11 : i64} {
  func.func @_stats_kernel(%arg0: i32, %arg1: memref<1024x128xf32, #tpu.memory_space<vmem>>, %arg2: memref<1x1024xi32, #tpu.memory_space<vmem>>, %arg3: memref<8x128xf32, #tpu.memory_space<vmem>>, %arg4: memref<8x128xf32, #tpu.memory_space<vmem>>) attributes {dimension_semantics = [#tpu.dimension_semantics<arbitrary>], iteration_bounds = array<i64: 3>, scalar_prefetch = 0 : i64, scratch_operands = 0 : i64, tpu.core_type = #tpu.core_type<tc>, window_params = [{transform_indices = @transform_0, window_bounds = array<i64: 1024, 128>}, {transform_indices = @transform_1, window_bounds = array<i64: 1, 1024>}, {pipeline_mode = #tpu.pipeline_mode<synchronous>, transform_indices = @transform_2, window_bounds = array<i64: 8, 128>}, {pipeline_mode = #tpu.pipeline_mode<synchronous>, transform_indices = @transform_3, window_bounds = array<i64: 8, 128>}]} {
    %c0_i32 = arith.constant 0 : i32
    %0 = arith.cmpi eq, %arg0, %c0_i32 : i32
    %1 = arith.extui %0 : i1 to i32
    %c0_i32_0 = arith.constant 0 : i32
    %2 = arith.cmpi ne, %1, %c0_i32_0 : i32
    scf.if %2 {
      %cst_14 = arith.constant 0.000000e+00 : f32
      %29 = vector.broadcast %cst_14 : f32 to vector<8x128xf32>
      %c0_15 = arith.constant 0 : index
      %c0_16 = arith.constant 0 : index
      %30 = vector.load %arg3[%c0_15, %c0_16] : memref<8x128xf32, #tpu.memory_space<vmem>>, vector<8x128xf32>
      tpu.vector_store %arg3[%c0_15, %c0_16], %29 {strides = array<i32>} : memref<8x128xf32, #tpu.memory_space<vmem>>, vector<8x128xf32>,
      %cst_17 = arith.constant 0.000000e+00 : f32
      %31 = vector.broadcast %cst_17 : f32 to vector<8x128xf32>
      %c0_18 = arith.constant 0 : index
      %c0_19 = arith.constant 0 : index
      %32 = vector.load %arg4[%c0_18, %c0_19] : memref<8x128xf32, #tpu.memory_space<vmem>>, vector<8x128xf32>
      tpu.vector_store %arg4[%c0_18, %c0_19], %31 {strides = array<i32>} : memref<8x128xf32, #tpu.memory_space<vmem>>, vector<8x128xf32>,
    } else {
    }
    %3 = tpu.iota {dimensions = array<i32: 0>} : vector<1024x1xi32>
    %c1024_i32 = arith.constant 1024 : i32
    %4 = arith.muli %arg0, %c1024_i32 : i32
    %5 = vector.broadcast %4 : i32 to vector<1024x1xi32>
    %6 = arith.addi %3, %5 : vector<1024x1xi32>
    %c3000_i32 = arith.constant 3000 : i32
    %7 = vector.broadcast %c3000_i32 : i32 to vector<1024x1xi32>
    %8 = arith.cmpi slt, %6, %7 : vector<1024x1xi32>
    %c0 = arith.constant 0 : index
    %c0_1 = arith.constant 0 : index
    %9 = vector.load %arg1[%c0, %c0_1] : memref<1024x128xf32, #tpu.memory_space<vmem>>, vector<1024x128xf32>
    %cst = arith.constant 0.000000e+00 : f32
    %10 = vector.shape_cast %8 : vector<1024x1xi1> to vector<1024x1xi1>
    %11 = vector.broadcast %10 : vector<1024x1xi1> to vector<1024x128xi1>
    %12 = vector.broadcast %cst : f32 to vector<1024x128xf32>
    %13 = arith.select %11, %9, %12 : vector<1024x128xi1>, vector<1024x128xf32>
    %c0_2 = arith.constant 0 : index
    %c0_3 = arith.constant 0 : index
    %14 = vector.load %arg2[%c0_2, %c0_3] : memref<1x1024xi32, #tpu.memory_space<vmem>>, vector<1x1024xi32>
    %15 = tpu.iota {dimensions = array<i32: 0>} : vector<8x1024xi32>
    %16 = vector.broadcast %14 : vector<1x1024xi32> to vector<8x1024xi32>
    %17 = arith.cmpi eq, %15, %16 : vector<8x1024xi32>
    %18 = arith.extui %17 : vector<8x1024xi1> to vector<8x1024xi32>
    %19 = arith.sitofp %18 : vector<8x1024xi32> to vector<8x1024xf32>
    %c0_4 = arith.constant 0 : index
    %c0_5 = arith.constant 0 : index
    %20 = vector.load %arg3[%c0_4, %c0_5] : memref<8x128xf32, #tpu.memory_space<vmem>>, vector<8x128xf32>
    %cst_6 = arith.constant dense<0.000000e+00> : vector<8x128xf32>
    %21 = tpu.matmul %19, %13, %cst_6 {dimension_numbers = #tpu.dot_dimension_numbers<[1], [0], [0], [1], [0, 0, 1, 1], [], []>} : vector<8x1024xf32>, vector<1024x128xf32>, vector<8x128xf32> -> vector<8x128xf32>
    %22 = arith.addf %20, %21 : vector<8x128xf32>
    %c0_7 = arith.constant 0 : index
    %c0_8 = arith.constant 0 : index
    %23 = vector.load %arg3[%c0_7, %c0_8] : memref<8x128xf32, #tpu.memory_space<vmem>>, vector<8x128xf32>
    tpu.vector_store %arg3[%c0_7, %c0_8], %22 {strides = array<i32>} : memref<8x128xf32, #tpu.memory_space<vmem>>, vector<8x128xf32>,
    %c0_9 = arith.constant 0 : index
    %c0_10 = arith.constant 0 : index
    %24 = vector.load %arg4[%c0_9, %c0_10] : memref<8x128xf32, #tpu.memory_space<vmem>>, vector<8x128xf32>
    %25 = arith.mulf %13, %13 : vector<1024x128xf32>
    %cst_11 = arith.constant dense<0.000000e+00> : vector<8x128xf32>
    %26 = tpu.matmul %19, %25, %cst_11 {dimension_numbers = #tpu.dot_dimension_numbers<[1], [0], [0], [1], [0, 0, 1, 1], [], []>} : vector<8x1024xf32>, vector<1024x128xf32>, vector<8x128xf32> -> vector<8x128xf32>
    %27 = arith.addf %24, %26 : vector<8x128xf32>
    %c0_12 = arith.constant 0 : index
    %c0_13 = arith.constant 0 : index
    %28 = vector.load %arg4[%c0_12, %c0_13] : memref<8x128xf32, #tpu.memory_space<vmem>>, vector<8x128xf32>
    tpu.vector_store %arg4[%c0_12, %c0_13], %27 {strides = array<i32>} : memref<8x128xf32, #tpu.memory_space<vmem>>, vector<8x128xf32>,
    return
  }
  func.func @transform_0(%arg0: i32) -> (i32, i32) {
    %c0_i32 = arith.constant 0 : i32
    %c0_i32_0 = arith.constant 0 : i32
    return %arg0, %c0_i32 : i32, i32
  }
  func.func @transform_1(%arg0: i32) -> (i32, i32) {
    %c0_i32 = arith.constant 0 : i32
    %c0_i32_0 = arith.constant 0 : i32
    return %c0_i32, %arg0 : i32, i32
  }
  func.func @transform_2(%arg0: i32) -> (i32, i32) {
    %c0_i32 = arith.constant 0 : i32
    %c0_i32_0 = arith.constant 0 : i32
    %c0_i32_1 = arith.constant 0 : i32
    return %c0_i32, %c0_i32_0 : i32, i32
  }
  func.func @transform_3(%arg0: i32) -> (i32, i32) {
    %c0_i32 = arith.constant 0 : i32
    %c0_i32_0 = arith.constant 0 : i32
    %c0_i32_1 = arith.constant 0 : i32
    return %c0_i32, %c0_i32_0 : i32, i32
  }
}

</mosaic_0001>

<llo_original>
// kernel: tpu_custom_call.1
$region0: #{tpu_custom_call.1}
  #allocation0 [shape = 'u32[]', space=smem, size = 0x4, offset = 0x4, fixed_abs, tag = 'smem constant byte address 0x4 - core index']
  #allocation1 [shape = 'u32[72,128]{1,0:T(1,128)}', space=vmem, size = 0x9000, scoped, tag = 'internal scratch']
  %s0 = inlined_call_operand.hbm [shape: f32[3000,128], index: 0, kind: input, shape index: {}]
  %s1 = inlined_call_operand.hbm [shape: s32[1,3000], index: 1, kind: input, shape index: {}]
  %s2 = inlined_call_operand.hbm [shape: f32[8,128], index: 2, kind: output, shape index: {0}]
  %s3 = inlined_call_operand.hbm [shape: f32[8,128], index: 3, kind: output, shape index: {1}]
  %4 = xla_tuple %s2, %s3
  %s5 = sld [smem:[#allocation0]]
  $region61: #{tpu_custom_call.1} parent=0
    _
  %s7 = ssub.s32 1, %s5
  %s8 = scalar_select 0, %s7, %s5
  $region1: #{tpu_custom_call.1} parent=0
    #allocation2 [shape = 'u8[1048576]{0}', space=vmem, size = 0x100000, scoped, tag = 'input window, operand 0']
    #allocation3 [shape = 's32[2]{0}', space=sflag, size = 0x8, scoped, tag = 'scoped memory for tpu_custom_call.1']
    #allocation4 [shape = 's32[2]{0}', space=sflag, size = 0x8, scoped, tag = 'scoped memory for tpu_custom_call.1']
    #allocation5 [shape = 'u8[8192]{0}', space=vmem, size = 0x2000, scoped, tag = 'input window, operand 1']
    #allocation6 [shape = 's32[2]{0}', space=sflag, size = 0x8, scoped, tag = 'scoped memory for tpu_custom_call.1']
    #allocation7 [shape = 'u8[4096]{0}', space=vmem, size = 0x1000, scoped, tag = 'output window, operand 0, single buffered']
    #allocation8 [shape = 'u8[4096]{0}', space=vmem, size = 0x1000, scoped, tag = 'output window, operand 1, single buffered']
    #allocation9 [shape = 's32[1]{0}', space=sflag, size = 0x4, scoped, tag = 'scoped memory for tpu_custom_call.1']
    %9 = vsyncpa [#allocation3], 0
    %s10 = scalar_lea.sflag [#allocation3], 1
    %11 = vsyncpa %s10, 0
    %12 = vsyncpa [#allocation6], 0
    %s13 = scalar_lea.sflag [#allocation6], 1
    %14 = vsyncpa %s13, 0
    %15 = vsyncpa [#allocation4], 0
    %16 = vsyncpa [#allocation9], 0
    loop: start=0, step=1, limit=5
    $region2: #{tpu_custom_call.1} parent=1 // loop_pre_header
      _
    $region3: #{tpu_custom_call.1} parent=1 // loop_header
      %s18 = sphi 0, %s22
      %p19 = scmp.ge.s32.totalorder %s18, 5
      %s28 = sphi 0, %s30
      %s31 = sphi 0, %s28
      %s32 = sphi 0, %s31
      %s48 = sphi 0, %s32
      %s54 = sphi 0, %s56
      %s57 = sphi 0, %s54
      %s58 = sphi 0, %s57
      %s74 = sphi 0, %s58
      %s78 = sphi 0, %s78
      %s80 = sphi 0, %s78
      %s81 = sphi 0, %s80
      %s95 = sphi 0, %s81
      %s99 = sphi 0, %s99
      %s101 = sphi 0, %s99
      %s102 = sphi 0, %s101
      %s116 = sphi 0, %s102
    $region4: #{tpu_custom_call.1} parent=1 // loop_header_branch
      %21 = sbr.rel (%p19) target = $region8
    $region5: #{tpu_custom_call.1} parent=1 // loop_body
      %s23 = ssub.s32 %s18, 1
      %s24 = ssub.s32 %s18, 2
      %s25 = sadd.s32 %s18, 1
      %s26 = ssub.s32 %s18, %s25
      %p27 = scmp.eq.s32.totalorder %s26, 0
      %s29 = sadd.s32 %s28, 1
      %s30 = scalar_select %p27, %s28, %s29
      %p33 = pneg %p27
      %p34 = scmp.eq.s32.totalorder %s18, 2
      %p35 = por %p33, %p34
      %p36 = scmp.ne.s32.totalorder %s28, %s31
      %p37 = scmp.eq.s32.totalorder %s18, 0
      %p38 = por %p36, %p37
      %p39 = scmp.ne.s32.totalorder %s28, %s31
      %p40 = scmp.eq.s32.totalorder %s23, 2
      %p41 = por %p39, %p40
      %p42 = scmp.ne.s32.totalorder %s31, %s32
      %p43 = scmp.eq.s32.totalorder %s23, 0
      %p44 = por %p42, %p43
      %p45 = scmp.ne.s32.totalorder %s31, %s32
      %p46 = scmp.eq.s32.totalorder %s24, 2
      %p47 = por %p45, %p46
      %p49 = scmp.ne.s32.totalorder %s32, %s48
      %p50 = scmp.eq.s32.totalorder %s24, 0
      %p51 = por %p49, %p50
      %s52 = ssub.s32 %s18, %s25
      %p53 = scmp.eq.s32.totalorder %s52, 0
      %s55 = sadd.s32 %s54, 1
      %s56 = scalar_select %p53, %s54, %s55
      %p59 = pneg %p53
      %p60 = scmp.eq.s32.totalorder %s18, 2
      %p61 = por %p59, %p60
      %p62 = scmp.ne.s32.totalorder %s54, %s57
      %p63 = scmp.eq.s32.totalorder %s18, 0
      %p64 = por %p62, %p63
      %p65 = scmp.ne.s32.totalorder %s54, %s57
      %p66 = scmp.eq.s32.totalorder %s23, 2
      %p67 = por %p65, %p66
      %p68 = scmp.ne.s32.totalorder %s57, %s58
      %p69 = scmp.eq.s32.totalorder %s23, 0
      %p70 = por %p68, %p69
      %p71 = scmp.ne.s32.totalorder %s57, %s58
      %p72 = scmp.eq.s32.totalorder %s24, 2
      %p73 = por %p71, %p72
      %p75 = scmp.ne.s32.totalorder %s58, %s74
      %p76 = scmp.eq.s32.totalorder %s24, 0
      %p77 = por %p75, %p76
      %s79 = sadd.s32 %s78, 1
      %p82 = scmp.eq.s32.totalorder %s18, 2
      %p83 = scmp.ne.s32.totalorder %s78, %s80
      %p84 = scmp.eq.s32.totalorder %s18, 0
      %p85 = por %p83, %p84
      %p86 = scmp.ne.s32.totalorder %s78, %s80
      %p87 = scmp.eq.s32.totalorder %s23, 2
      %p88 = por %p86, %p87
      %p89 = scmp.ne.s32.totalorder %s80, %s81
      %p90 = scmp.eq.s32.totalorder %s23, 0
      %p91 = por %p89, %p90
      %p92 = scmp.ne.s32.totalorder %s80, %s81
      %p93 = scmp.eq.s32.totalorder %s24, 2
      %p94 = por %p92, %p93
      %p96 = scmp.ne.s32.totalorder %s81, %s95
      %p97 = scmp.eq.s32.totalorder %s24, 0
      %p98 = por %p96, %p97
      %s100 = sadd.s32 %s99, 1
      %p103 = scmp.eq.s32.totalorder %s18, 2
      %p104 = scmp.ne.s32.totalorder %s99, %s101
      %p105 = scmp.eq.s32.totalorder %s18, 0
      %p106 = por %p104, %p105
      %p107 = scmp.ne.s32.totalorder %s99, %s101
      %p108 = scmp.eq.s32.totalorder %s23, 2
      %p109 = por %p107, %p108
      %p110 = scmp.ne.s32.totalorder %s101, %s102
      %p111 = scmp.eq.s32.totalorder %s23, 0
      %p112 = por %p110, %p111
      %p113 = scmp.ne.s32.totalorder %s101, %s102
      %p114 = scmp.eq.s32.totalorder %s24, 2
      %p115 = por %p113, %p114
      %p117 = scmp.ne.s32.totalorder %s102, %s116
      %p118 = scmp.eq.s32.totalorder %s24, 0
      %p119 = por %p117, %p118
      %p120 = scmp.le.s32.totalorder 1, %s18
      %p121 = scmp.lt.s32.totalorder %s18, 4
      %p122 = pnand %p120, %p121
      %p123 = pneg %p122
      // Predicated region
      $region9: #{tpu_custom_call.1} parent=5 // pred_check
        _
      $region10: #{tpu_custom_call.1} parent=5 // pred_check_branch
        %125 = sbr.rel (%p122) target = $region12
      $region11: #{tpu_custom_call.1} parent=5 // pred_region
        %s126 = ssub.s32 %s18, 1
      $region12: #{tpu_custom_call.1} parent=5 // pred_fallthru
        _
      %p127 = scmp.lt.s32.totalorder %s18, 3
      // Predicated region
      $region13: #{tpu_custom_call.1} parent=5 // pred_check
        %p128 = pneg %p127
      $region14: #{tpu_custom_call.1} parent=5 // pred_check_branch
        %130 = sbr.rel (%p128) target = $region16
      $region15: #{tpu_custom_call.1} parent=5 // pred_region
        // Predicated region
        $region17: #{tpu_custom_call.1} parent=15 // pred_check
          %p131 = pneg %p38
        $region18: #{tpu_custom_call.1} parent=15 // pred_check_branch
          %133 = sbr.rel (%p131) target = $region20
        $region19: #{tpu_custom_call.1} parent=15 // pred_region
          %s134 = sand.u32 %s28, 1
          %s135 = scalar_lea.sflag [#allocation3], %s134
          %s136 = sand.u32 %s28, 1
          %s137 = smul.addr %s136, 1024
          %s138 = scalar_lea.vmem [#allocation2], %s137
          %s139 = smul.u32 128, %s18
          %s140 = ssub.s32 375, %s139
          %p141 = scmp.lt.s32.totalorder %s140, 128
          %s142 = scalar_select %p141, %s140, 128
          %s143 = smul.u32 8, %s142
          %s144 = ssub.s32 1024, %s143
          %s145 = sshll.u32 %s144, 4
          %146 = vsyncadd %s135, %s145
          %p147 = scmp.ne.s32.totalorder 0, %s143
          %s148 = smul.addr %s139, 8
          %s149 = scalar_lea.hbm %s0, %s148
          %s150 = smul.u32 8, %s142
          %s151 = sshll.u32 %s149, 4
          %s152 = int_to_ptr.hbm [resolvable:$true] %s151
          %s153 = sshll.u32 %s138, 4
          %s154 = int_to_ptr.vmem [resolvable:$true] %s153
          %s155 = sshll.u32 %s150, 4
          %159 = dma.hbm_to_vmem [thread:$0]  (%p147), %s152, %s155, %s154, %s135, 128, 128, 8
        $region20: #{tpu_custom_call.1} parent=15 // pred_fallthru
          _
        // Predicated region
        $region21: #{tpu_custom_call.1} parent=15 // pred_check
          %p160 = pneg %p64
        $region22: #{tpu_custom_call.1} parent=15 // pred_check_branch
          %162 = sbr.rel (%p160) target = $region24
        $region23: #{tpu_custom_call.1} parent=15 // pred_region
          %s163 = sand.u32 %s54, 1
          %s164 = scalar_lea.sflag [#allocation6], %s163
          %s165 = sand.u32 %s54, 1
          %s166 = smul.addr %s165, 8
          %s167 = scalar_lea.vmem [#allocation5], %s166
          %s168 = smul.u32 8, %s18
          %170 = vsyncadd %s164, 0
          %s171 = scalar_lea.hbm %s1, %s168
          %s173 = sshll.u32 %s171, 4
          %s174 = int_to_ptr.hbm [resolvable:$true] %s173
          %s175 = sshll.u32 %s167, 4
          %s176 = int_to_ptr.vmem [resolvable:$true] %s175
          %178 = dma.hbm_to_vmem [thread:$0]  %s174, 128, %s176, %s164
        $region24: #{tpu_custom_call.1} parent=15 // pred_fallthru
          _
      $region16: #{tpu_custom_call.1} parent=5 // pred_fallthru
        _
      %p179 = scmp.le.s32.totalorder 1, %s18
      %p180 = scmp.lt.s32.totalorder %s18, 4
      %p181 = pnand %p179, %p180
      %p182 = pneg %p181
      // Predicated region
      $region25: #{tpu_custom_call.1} parent=5 // pred_check
        _
      $region26: #{tpu_custom_call.1} parent=5 // pred_check_branch
        %184 = sbr.rel (%p181) target = $region28
      $region27: #{tpu_custom_call.1} parent=5 // pred_region
        %s185 = ssub.s32 %s18, 1
        %s186 = sand.u32 %s31, 1
        %s187 = scalar_lea.sflag [#allocation3], %s186
        %s188 = sand.u32 %s31, 1
        %s189 = smul.addr %s188, 1024
        %s190 = scalar_lea.vmem [#allocation2], %s189
        // Predicated region
        $region29: #{tpu_custom_call.1} parent=27 // pred_check
          %p191 = pneg %p44
        $region30: #{tpu_custom_call.1} parent=27 // pred_check_branch
          %193 = sbr.rel (%p191) target = $region32
        $region31: #{tpu_custom_call.1} parent=27 // pred_region
          %195 = dma.done %s187, 16384
        $region32: #{tpu_custom_call.1} parent=27 // pred_fallthru
          _
        %s196 = sand.u32 %s57, 1
        %s197 = scalar_lea.sflag [#allocation6], %s196
        %s198 = sand.u32 %s57, 1
        %s199 = smul.addr %s198, 8
        %s200 = scalar_lea.vmem [#allocation5], %s199
        // Predicated region
        $region33: #{tpu_custom_call.1} parent=27 // pred_check
          %p201 = pneg %p70
        $region34: #{tpu_custom_call.1} parent=27 // pred_check_branch
          %203 = sbr.rel (%p201) target = $region36
        $region35: #{tpu_custom_call.1} parent=27 // pred_region
          %205 = dma.done %s197, 128
        $region36: #{tpu_custom_call.1} parent=27 // pred_fallthru
          _
        %s206 = sand.u32 %s31, 1
        %s207 = scalar_lea.sflag [#allocation3], %s206
        %s208 = sand.u32 %s31, 1
        %s209 = smul.addr %s208, 1024
        %s210 = scalar_lea.vmem [#allocation2], %s209
        %p211 = pneg %p44
        %p212 = pneg %p41
        %s213 = sand.u32 %s57, 1
        %s214 = scalar_lea.sflag [#allocation6], %s213
        %s215 = sand.u32 %s57, 1
        %s216 = smul.addr %s215, 8
        %s217 = scalar_lea.vmem [#allocation5], %s216
        %p218 = pneg %p70
        %p219 = pneg %p67
        %p220 = pneg %p91
        %p221 = pneg %p88
        %p222 = pneg %p112
        %p223 = pneg %p109
        %s224 = smul.u32 128, %s23
        %s225 = ssub.s32 375, %s224
        %p226 = scmp.lt.s32.totalorder %s225, 128
        %s227 = scalar_select %p226, %s225, 128
        %s228 = smul.u32 8, %s227
        %s229 = smul.u32 8, %s23
        %p230 = scmp.eq.s32.totalorder %s23, 0
        // Predicated region
        $region37: #{tpu_custom_call.1} parent=27 // pred_check
          %p231 = pneg %p230
        $region38: #{tpu_custom_call.1} parent=27 // pred_check_branch
          %233 = sbr.rel (%p231) target = $region40
        $region39: #{tpu_custom_call.1} parent=27 // pred_region
          %234 = vst [vmem:[#allocation7] sm:$0xff] 0.0
          %235 = vst [vmem:[#allocation8] sm:$0xff] 0.0
        $region40: #{tpu_custom_call.1} parent=27 // pred_fallthru
          _
        %v236 = vlaneseq
        %v237 = vshrl.u32 %v236, 7
        %v238 = vadd.s32 %v237, 8
        %v239 = vadd.s32 %v237, 16
        %v240 = vadd.s32 %v237, 24
        %v241 = vadd.s32 %v237, 32
        %v242 = vadd.s32 %v237, 40
        %v243 = vadd.s32 %v237, 48
        %v244 = vadd.s32 %v237, 56
        %v245 = vadd.s32 %v237, 64
        %v246 = vadd.s32 %v237, 72
        %v247 = vadd.s32 %v237, 80
        %v248 = vadd.s32 %v237, 88
        %v249 = vadd.s32 %v237, 96
        %v250 = vadd.s32 %v237, 104
        %v251 = vadd.s32 %v237, 112
        %v252 = vadd.s32 %v237, 120
        %v253 = vadd.s32 %v237, 128
        %v254 = vadd.s32 %v237, 136
        %v255 = vadd.s32 %v237, 144
        %v256 = vadd.s32 %v237, 152
        %v257 = vadd.s32 %v237, 160
        %v258 = vadd.s32 %v237, 168
        %v259 = vadd.s32 %v237, 176
        %v260 = vadd.s32 %v237, 184
        %v261 = vadd.s32 %v237, 192
        %v262 = vadd.s32 %v237, 200
        %v263 = vadd.s32 %v237, 208
        %v264 = vadd.s32 %v237, 216
        %v265 = vadd.s32 %v237, 224
        %v266 = vadd.s32 %v237, 232
        %v267 = vadd.s32 %v237, 240
        %v268 = vadd.s32 %v237, 248
        %v269 = vadd.s32 %v237, 256
        %v270 = vadd.s32 %v237, 264
        %v271 = vadd.s32 %v237, 272
        %v272 = vadd.s32 %v237, 280
        %v273 = vadd.s32 %v237, 288
        %v274 = vadd.s32 %v237, 296
        %v275 = vadd.s32 %v237, 304
        %v276 = vadd.s32 %v237, 312
        %v277 = vadd.s32 %v237, 320
        %v278 = vadd.s32 %v237, 328
        %v279 = vadd.s32 %v237, 336
        %v280 = vadd.s32 %v237, 344
        %v281 = vadd.s32 %v237, 352
        %v282 = vadd.s32 %v237, 360
        %v283 = vadd.s32 %v237, 368
        %v284 = vadd.s32 %v237, 376
        %v285 = vadd.s32 %v237, 384
        %v286 = vadd.s32 %v237, 392
        %v287 = vadd.s32 %v237, 400
        %v288 = vadd.s32 %v237, 408
        %v289 = vadd.s32 %v237, 416
        %v290 = vadd.s32 %v237, 424
        %v291 = vadd.s32 %v237, 432
        %v292 = vadd.s32 %v237, 440
        %v293 = vadd.s32 %v237, 448
        %v294 = vadd.s32 %v237, 456
        %v295 = vadd.s32 %v237, 464
        %v296 = vadd.s32 %v237, 472
        %v297 = vadd.s32 %v237, 480
        %v298 = vadd.s32 %v237, 488
        %v299 = vadd.s32 %v237, 496
        %v300 = vadd.s32 %v237, 504
        %v301 = vadd.s32 %v237, 512
        %v302 = vadd.s32 %v237, 520
        %v303 = vadd.s32 %v237, 528
        %v304 = vadd.s32 %v237, 536
        %v305 = vadd.s32 %v237, 544
        %v306 = vadd.s32 %v237, 552
        %v307 = vadd.s32 %v237, 560
        %v308 = vadd.s32 %v237, 568
        %v309 = vadd.s32 %v237, 576
        %v310 = vadd.s32 %v237, 584
        %v311 = vadd.s32 %v237, 592
        %v312 = vadd.s32 %v237, 600
        %v313 = vadd.s32 %v237, 608
        %v314 = vadd.s32 %v237, 616
        %v315 = vadd.s32 %v237, 624
        %v316 = vadd.s32 %v237, 632
        %v317 = vadd.s32 %v237, 640
        %v318 = vadd.s32 %v237, 648
        %v319 = vadd.s32 %v237, 656
        %v320 = vadd.s32 %v237, 664
        %v321 = vadd.s32 %v237, 672
        %v322 = vadd.s32 %v237, 680
        %v323 = vadd.s32 %v237, 688
        %v324 = vadd.s32 %v237, 696
        %v325 = vadd.s32 %v237, 704
        %v326 = vadd.s32 %v237, 712
        %v327 = vadd.s32 %v237, 720
        %v328 = vadd.s32 %v237, 728
        %v329 = vadd.s32 %v237, 736
        %v330 = vadd.s32 %v237, 744
        %v331 = vadd.s32 %v237, 752
        %v332 = vadd.s32 %v237, 760
        %v333 = vadd.s32 %v237, 768
        %v334 = vadd.s32 %v237, 776
        %v335 = vadd.s32 %v237, 784
        %v336 = vadd.s32 %v237, 792
        %v337 = vadd.s32 %v237, 800
        %v338 = vadd.s32 %v237, 808
        %v339 = vadd.s32 %v237, 816
        %v340 = vadd.s32 %v237, 824
        %v341 = vadd.s32 %v237, 832
        %v342 = vadd.s32 %v237, 840
        %v343 = vadd.s32 %v237, 848
        %v344 = vadd.s32 %v237, 856
        %v345 = vadd.s32 %v237, 864
        %v346 = vadd.s32 %v237, 872
        %v347 = vadd.s32 %v237, 880
        %v348 = vadd.s32 %v237, 888
        %v349 = vadd.s32 %v237, 896
        %v350 = vadd.s32 %v237, 904
        %v351 = vadd.s32 %v237, 912
        %v352 = vadd.s32 %v237, 920
        %v353 = vadd.s32 %v237, 928
        %v354 = vadd.s32 %v237, 936
        %v355 = vadd.s32 %v237, 944
        %v356 = vadd.s32 %v237, 952
        %v357 = vadd.s32 %v237, 960
        %v358 = vadd.s32 %v237, 968
        %v359 = vadd.s32 %v237, 976
        %v360 = vadd.s32 %v237, 984
        %v361 = vadd.s32 %v237, 992
        %v362 = vadd.s32 %v237, 1000
        %v363 = vadd.s32 %v237, 1008
        %v364 = vadd.s32 %v237, 1016
        %s365 = smul.u32 %s23, 1024
        %v366 = vstv %s365
        %v367 = vadd.s32 %v237, %v366
        %v368 = vadd.s32 %v238, %v366
        %v369 = vadd.s32 %v239, %v366
        %v370 = vadd.s32 %v240, %v366
        %v371 = vadd.s32 %v241, %v366
        %v372 = vadd.s32 %v242, %v366
        %v373 = vadd.s32 %v243, %v366
        %v374 = vadd.s32 %v244, %v366
        %v375 = vadd.s32 %v245, %v366
        %v376 = vadd.s32 %v246, %v366
        %v377 = vadd.s32 %v247, %v366
        %v378 = vadd.s32 %v248, %v366
        %v379 = vadd.s32 %v249, %v366
        %v380 = vadd.s32 %v250, %v366
        %v381 = vadd.s32 %v251, %v366
        %v382 = vadd.s32 %v252, %v366
        %v383 = vadd.s32 %v253, %v366
        %v384 = vadd.s32 %v254, %v366
        %v385 = vadd.s32 %v255, %v366
        %v386 = vadd.s32 %v256, %v366
        %v387 = vadd.s32 %v257, %v366
        %v388 = vadd.s32 %v258, %v366
        %v389 = vadd.s32 %v259, %v366
        %v390 = vadd.s32 %v260, %v366
        %v391 = vadd.s32 %v261, %v366
        %v392 = vadd.s32 %v262, %v366
        %v393 = vadd.s32 %v263, %v366
        %v394 = vadd.s32 %v264, %v366
        %v395 = vadd.s32 %v265, %v366
        %v396 = vadd.s32 %v266, %v366
        %v397 = vadd.s32 %v267, %v366
        %v398 = vadd.s32 %v268, %v366
        %v399 = vadd.s32 %v269, %v366
        %v400 = vadd.s32 %v270, %v366
        %v401 = vadd.s32 %v271, %v366
        %v402 = vadd.s32 %v272, %v366
        %v403 = vadd.s32 %v273, %v366
        %v404 = vadd.s32 %v274, %v366
        %v405 = vadd.s32 %v275, %v366
        %v406 = vadd.s32 %v276, %v366
        %v407 = vadd.s32 %v277, %v366
        %v408 = vadd.s32 %v278, %v366
        %v409 = vadd.s32 %v279, %v366
        %v410 = vadd.s32 %v280, %v366
        %v411 = vadd.s32 %v281, %v366
        %v412 = vadd.s32 %v282, %v366
        %v413 = vadd.s32 %v283, %v366
        %v414 = vadd.s32 %v284, %v366
        %v415 = vadd.s32 %v285, %v366
        %v416 = vadd.s32 %v286, %v366
        %v417 = vadd.s32 %v287, %v366
        %v418 = vadd.s32 %v288, %v366
        %v419 = vadd.s32 %v289, %v366
        %v420 = vadd.s32 %v290, %v366
        %v421 = vadd.s32 %v291, %v366
        %v422 = vadd.s32 %v292, %v366
        %v423 = vadd.s32 %v293, %v366
        %v424 = vadd.s32 %v294, %v366
        %v425 = vadd.s32 %v295, %v366
        %v426 = vadd.s32 %v296, %v366
        %v427 = vadd.s32 %v297, %v366
        %v428 = vadd.s32 %v298, %v366
        %v429 = vadd.s32 %v299, %v366
        %v430 = vadd.s32 %v300, %v366
        %v431 = vadd.s32 %v301, %v366
        %v432 = vadd.s32 %v302, %v366
        %v433 = vadd.s32 %v303, %v366
        %v434 = vadd.s32 %v304, %v366
        %v435 = vadd.s32 %v305, %v366
        %v436 = vadd.s32 %v306, %v366
        %v437 = vadd.s32 %v307, %v366
        %v438 = vadd.s32 %v308, %v366
        %v439 = vadd.s32 %v309, %v366
        %v440 = vadd.s32 %v310, %v366
        %v441 = vadd.s32 %v311, %v366
        %v442 = vadd.s32 %v312, %v366
        %v443 = vadd.s32 %v313, %v366
        %v444 = vadd.s32 %v314, %v366
        %v445 = vadd.s32 %v315, %v366
        %v446 = vadd.s32 %v316, %v366
        %v447 = vadd.s32 %v317, %v366
        %v448 = vadd.s32 %v318, %v366
        %v449 = vadd.s32 %v319, %v366
        %v450 = vadd.s32 %v320, %v366
        %v451 = vadd.s32 %v321, %v366
        %v452 = vadd.s32 %v322, %v366
        %v453 = vadd.s32 %v323, %v366
        %v454 = vadd.s32 %v324, %v366
        %v455 = vadd.s32 %v325, %v366
        %v456 = vadd.s32 %v326, %v366
        %v457 = vadd.s32 %v327, %v366
        %v458 = vadd.s32 %v328, %v366
        %v459 = vadd.s32 %v329, %v366
        %v460 = vadd.s32 %v330, %v366
        %v461 = vadd.s32 %v331, %v366
        %v462 = vadd.s32 %v332, %v366
        %v463 = vadd.s32 %v333, %v366
        %v464 = vadd.s32 %v334, %v366
        %v465 = vadd.s32 %v335, %v366
        %v466 = vadd.s32 %v336, %v366
        %v467 = vadd.s32 %v337, %v366
        %v468 = vadd.s32 %v338, %v366
        %v469 = vadd.s32 %v339, %v366
        %v470 = vadd.s32 %v340, %v366
        %v471 = vadd.s32 %v341, %v366
        %v472 = vadd.s32 %v342, %v366
        %v473 = vadd.s32 %v343, %v366
        %v474 = vadd.s32 %v344, %v366
        %v475 = vadd.s32 %v345, %v366
        %v476 = vadd.s32 %v346, %v366
        %v477 = vadd.s32 %v347, %v366
        %v478 = vadd.s32 %v348, %v366
        %v479 = vadd.s32 %v349, %v366
        %v480 = vadd.s32 %v350, %v366
        %v481 = vadd.s32 %v351, %v366
        %v482 = vadd.s32 %v352, %v366
        %v483 = vadd.s32 %v353, %v366
        %v484 = vadd.s32 %v354, %v366
        %v485 = vadd.s32 %v355, %v366
        %v486 = vadd.s32 %v356, %v366
        %v487 = vadd.s32 %v357, %v366
        %v488 = vadd.s32 %v358, %v366
        %v489 = vadd.s32 %v359, %v366
        %v490 = vadd.s32 %v360, %v366
        %v491 = vadd.s32 %v361, %v366
        %v492 = vadd.s32 %v362, %v366
        %v493 = vadd.s32 %v363, %v366
        %v494 = vadd.s32 %v364, %v366
        %vm495 = vcmp.lt.s32.totalorder %v367, 3000
        %vm496 = vcmp.lt.s32.totalorder %v368, 3000
        %vm497 = vcmp.lt.s32.totalorder %v369, 3000
        %vm498 = vcmp.lt.s32.totalorder %v370, 3000
        %vm499 = vcmp.lt.s32.totalorder %v371, 3000
        %vm500 = vcmp.lt.s32.totalorder %v372, 3000
        %vm501 = vcmp.lt.s32.totalorder %v373, 3000
        %vm502 = vcmp.lt.s32.totalorder %v374, 3000
        %vm503 = vcmp.lt.s32.totalorder %v375, 3000
        %vm504 = vcmp.lt.s32.totalorder %v376, 3000
        %vm505 = vcmp.lt.s32.totalorder %v377, 3000
        %vm506 = vcmp.lt.s32.totalorder %v378, 3000
        %vm507 = vcmp.lt.s32.totalorder %v379, 3000
        %vm508 = vcmp.lt.s32.totalorder %v380, 3000
        %vm509 = vcmp.lt.s32.totalorder %v381, 3000
        %vm510 = vcmp.lt.s32.totalorder %v382, 3000
        %vm511 = vcmp.lt.s32.totalorder %v383, 3000
        %vm512 = vcmp.lt.s32.totalorder %v384, 3000
        %vm513 = vcmp.lt.s32.totalorder %v385, 3000
        %vm514 = vcmp.lt.s32.totalorder %v386, 3000
        %vm515 = vcmp.lt.s32.totalorder %v387, 3000
        %vm516 = vcmp.lt.s32.totalorder %v388, 3000
        %vm517 = vcmp.lt.s32.totalorder %v389, 3000
        %vm518 = vcmp.lt.s32.totalorder %v390, 3000
        %vm519 = vcmp.lt.s32.totalorder %v391, 3000
        %vm520 = vcmp.lt.s32.totalorder %v392, 3000
        %vm521 = vcmp.lt.s32.totalorder %v393, 3000
        %vm522 = vcmp.lt.s32.totalorder %v394, 3000
        %vm523 = vcmp.lt.s32.totalorder %v395, 3000
        %vm524 = vcmp.lt.s32.totalorder %v396, 3000
        %vm525 = vcmp.lt.s32.totalorder %v397, 3000
        %vm526 = vcmp.lt.s32.totalorder %v398, 3000
        %vm527 = vcmp.lt.s32.totalorder %v399, 3000
        %vm528 = vcmp.lt.s32.totalorder %v400, 3000
        %vm529 = vcmp.lt.s32.totalorder %v401, 3000
        %vm530 = vcmp.lt.s32.totalorder %v402, 3000
        %vm531 = vcmp.lt.s32.totalorder %v403, 3000
        %vm532 = vcmp.lt.s32.totalorder %v404, 3000
        %vm533 = vcmp.lt.s32.totalorder %v405, 3000
        %vm534 = vcmp.lt.s32.totalorder %v406, 3000
        %vm535 = vcmp.lt.s32.totalorder %v407, 3000
        %vm536 = vcmp.lt.s32.totalorder %v408, 3000
        %vm537 = vcmp.lt.s32.totalorder %v409, 3000
        %vm538 = vcmp.lt.s32.totalorder %v410, 3000
        %vm539 = vcmp.lt.s32.totalorder %v411, 3000
        %vm540 = vcmp.lt.s32.totalorder %v412, 3000
        %vm541 = vcmp.lt.s32.totalorder %v413, 3000
        %vm542 = vcmp.lt.s32.totalorder %v414, 3000
        %vm543 = vcmp.lt.s32.totalorder %v415, 3000
        %vm544 = vcmp.lt.s32.totalorder %v416, 3000
        %vm545 = vcmp.lt.s32.totalorder %v417, 3000
        %vm546 = vcmp.lt.s32.totalorder %v418, 3000
        %vm547 = vcmp.lt.s32.totalorder %v419, 3000
        %vm548 = vcmp.lt.s32.totalorder %v420, 3000
        %vm549 = vcmp.lt.s32.totalorder %v421, 3000
        %vm550 = vcmp.lt.s32.totalorder %v422, 3000
        %vm551 = vcmp.lt.s32.totalorder %v423, 3000
        %vm552 = vcmp.lt.s32.totalorder %v424, 3000
        %vm553 = vcmp.lt.s32.totalorder %v425, 3000
        %vm554 = vcmp.lt.s32.totalorder %v426, 3000
        %vm555 = vcmp.lt.s32.totalorder %v427, 3000
        %vm556 = vcmp.lt.s32.totalorder %v428, 3000
        %vm557 = vcmp.lt.s32.totalorder %v429, 3000
        %vm558 = vcmp.lt.s32.totalorder %v430, 3000
        %vm559 = vcmp.lt.s32.totalorder %v431, 3000
        %vm560 = vcmp.lt.s32.totalorder %v432, 3000
        %vm561 = vcmp.lt.s32.totalorder %v433, 3000
        %vm562 = vcmp.lt.s32.totalorder %v434, 3000
        %vm563 = vcmp.lt.s32.totalorder %v435, 3000
        %vm564 = vcmp.lt.s32.totalorder %v436, 3000
        %vm565 = vcmp.lt.s32.totalorder %v437, 3000
        %vm566 = vcmp.lt.s32.totalorder %v438, 3000
        %vm567 = vcmp.lt.s32.totalorder %v439, 3000
        %vm568 = vcmp.lt.s32.totalorder %v440, 3000
        %vm569 = vcmp.lt.s32.totalorder %v441, 3000
        %vm570 = vcmp.lt.s32.totalorder %v442, 3000
        %vm571 = vcmp.lt.s32.totalorder %v443, 3000
        %vm572 = vcmp.lt.s32.totalorder %v444, 3000
        %vm573 = vcmp.lt.s32.totalorder %v445, 3000
        %vm574 = vcmp.lt.s32.totalorder %v446, 3000
        %vm575 = vcmp.lt.s32.totalorder %v447, 3000
        %vm576 = vcmp.lt.s32.totalorder %v448, 3000
        %vm577 = vcmp.lt.s32.totalorder %v449, 3000
        %vm578 = vcmp.lt.s32.totalorder %v450, 3000
        %vm579 = vcmp.lt.s32.totalorder %v451, 3000
        %vm580 = vcmp.lt.s32.totalorder %v452, 3000
        %vm581 = vcmp.lt.s32.totalorder %v453, 3000
        %vm582 = vcmp.lt.s32.totalorder %v454, 3000
        %vm583 = vcmp.lt.s32.totalorder %v455, 3000
        %vm584 = vcmp.lt.s32.totalorder %v456, 3000
        %vm585 = vcmp.lt.s32.totalorder %v457, 3000
        %vm586 = vcmp.lt.s32.totalorder %v458, 3000
        %vm587 = vcmp.lt.s32.totalorder %v459, 3000
        %vm588 = vcmp.lt.s32.totalorder %v460, 3000
        %vm589 = vcmp.lt.s32.totalorder %v461, 3000
        %vm590 = vcmp.lt.s32.totalorder %v462, 3000
        %vm591 = vcmp.lt.s32.totalorder %v463, 3000
        %vm592 = vcmp.lt.s32.totalorder %v464, 3000
        %vm593 = vcmp.lt.s32.totalorder %v465, 3000
        %vm594 = vcmp.lt.s32.totalorder %v466, 3000
        %vm595 = vcmp.lt.s32.totalorder %v467, 3000
        %vm596 = vcmp.lt.s32.totalorder %v468, 3000
        %vm597 = vcmp.lt.s32.totalorder %v469, 3000
        %vm598 = vcmp.lt.s32.totalorder %v470, 3000
        %vm599 = vcmp.lt.s32.totalorder %v471, 3000
        %vm600 = vcmp.lt.s32.totalorder %v472, 3000
        %vm601 = vcmp.lt.s32.totalorder %v473, 3000
        %vm602 = vcmp.lt.s32.totalorder %v474, 3000
        %vm603 = vcmp.lt.s32.totalorder %v475, 3000
        %vm604 = vcmp.lt.s32.totalorder %v476, 3000
        %vm605 = vcmp.lt.s32.totalorder %v477, 3000
        %vm606 = vcmp.lt.s32.totalorder %v478, 3000
        %vm607 = vcmp.lt.s32.totalorder %v479, 3000
        %vm608 = vcmp.lt.s32.totalorder %v480, 3000
        %vm609 = vcmp.lt.s32.totalorder %v481, 3000
        %vm610 = vcmp.lt.s32.totalorder %v482, 3000
        %vm611 = vcmp.lt.s32.totalorder %v483, 3000
        %vm612 = vcmp.lt.s32.totalorder %v484, 3000
        %vm613 = vcmp.lt.s32.totalorder %v485, 3000
        %vm614 = vcmp.lt.s32.totalorder %v486, 3000
        %vm615 = vcmp.lt.s32.totalorder %v487, 3000
        %vm616 = vcmp.lt.s32.totalorder %v488, 3000
        %vm617 = vcmp.lt.s32.totalorder %v489, 3000
        %vm618 = vcmp.lt.s32.totalorder %v490, 3000
        %vm619 = vcmp.lt.s32.totalorder %v491, 3000
        %vm620 = vcmp.lt.s32.totalorder %v492, 3000
        %vm621 = vcmp.lt.s32.totalorder %v493, 3000
        %vm622 = vcmp.lt.s32.totalorder %v494, 3000
        %v623 = vld [vmem:[%s190] sm:$0xff]
        %v624 = vld [vmem:[%s190 + $0x8] sm:$0xff]
        %v625 = vld [vmem:[%s190 + $0x10] sm:$0xff]
        %v626 = vld [vmem:[%s190 + $0x18] sm:$0xff]
        %v627 = vld [vmem:[%s190 + $0x20] sm:$0xff]
        %v628 = vld [vmem:[%s190 + $0x28] sm:$0xff]
        %v629 = vld [vmem:[%s190 + $0x30] sm:$0xff]
        %v630 = vld [vmem:[%s190 + $0x38] sm:$0xff]
        %v631 = vld [vmem:[%s190 + $0x40] sm:$0xff]
        %v632 = vld [vmem:[%s190 + $0x48] sm:$0xff]
        %v633 = vld [vmem:[%s190 + $0x50] sm:$0xff]
        %v634 = vld [vmem:[%s190 + $0x58] sm:$0xff]
        %v635 = vld [vmem:[%s190 + $0x60] sm:$0xff]
        %v636 = vld [vmem:[%s190 + $0x68] sm:$0xff]
        %v637 = vld [vmem:[%s190 + $0x70] sm:$0xff]
        %v638 = vld [vmem:[%s190 + $0x78] sm:$0xff]
        %v639 = vld [vmem:[%s190 + $0x80] sm:$0xff]
        %v640 = vld [vmem:[%s190 + $0x88] sm:$0xff]
        %v641 = vld [vmem:[%s190 + $0x90] sm:$0xff]
        %v642 = vld [vmem:[%s190 + $0x98] sm:$0xff]
        %v643 = vld [vmem:[%s190 + $0xa0] sm:$0xff]
        %v644 = vld [vmem:[%s190 + $0xa8] sm:$0xff]
        %v645 = vld [vmem:[%s190 + $0xb0] sm:$0xff]
        %v646 = vld [vmem:[%s190 + $0xb8] sm:$0xff]
        %v647 = vld [vmem:[%s190 + $0xc0] sm:$0xff]
        %v648 = vld [vmem:[%s190 + $0xc8] sm:$0xff]
        %v649 = vld [vmem:[%s190 + $0xd0] sm:$0xff]
        %v650 = vld [vmem:[%s190 + $0xd8] sm:$0xff]
        %v651 = vld [vmem:[%s190 + $0xe0] sm:$0xff]
        %v652 = vld [vmem:[%s190 + $0xe8] sm:$0xff]
        %v653 = vld [vmem:[%s190 + $0xf0] sm:$0xff]
        %v654 = vld [vmem:[%s190 + $0xf8] sm:$0xff]
        %v655 = vld [vmem:[%s190 + $0x100] sm:$0xff]
        %v656 = vld [vmem:[%s190 + $0x108] sm:$0xff]
        %v657 = vld [vmem:[%s190 + $0x110] sm:$0xff]
        %v658 = vld [vmem:[%s190 + $0x118] sm:$0xff]
        %v659 = vld [vmem:[%s190 + $0x120] sm:$0xff]
        %v660 = vld [vmem:[%s190 + $0x128] sm:$0xff]
        %v661 = vld [vmem:[%s190 + $0x130] sm:$0xff]
        %v662 = vld [vmem:[%s190 + $0x138] sm:$0xff]
        %v663 = vld [vmem:[%s190 + $0x140] sm:$0xff]
        %v664 = vld [vmem:[%s190 + $0x148] sm:$0xff]
        %v665 = vld [vmem:[%s190 + $0x150] sm:$0xff]
        %v666 = vld [vmem:[%s190 + $0x158] sm:$0xff]
        %v667 = vld [vmem:[%s190 + $0x160] sm:$0xff]
        %v668 = vld [vmem:[%s190 + $0x168] sm:$0xff]
        %v669 = vld [vmem:[%s190 + $0x170] sm:$0xff]
        %v670 = vld [vmem:[%s190 + $0x178] sm:$0xff]
        %v671 = vld [vmem:[%s190 + $0x180] sm:$0xff]
        %v672 = vld [vmem:[%s190 + $0x188] sm:$0xff]
        %v673 = vld [vmem:[%s190 + $0x190] sm:$0xff]
        %v674 = vld [vmem:[%s190 + $0x198] sm:$0xff]
        %v675 = vld [vmem:[%s190 + $0x1a0] sm:$0xff]
        %v676 = vld [vmem:[%s190 + $0x1a8] sm:$0xff]
        %v677 = vld [vmem:[%s190 + $0x1b0] sm:$0xff]
        %v678 = vld [vmem:[%s190 + $0x1b8] sm:$0xff]
        %v679 = vld [vmem:[%s190 + $0x1c0] sm:$0xff]
        %v680 = vld [vmem:[%s190 + $0x1c8] sm:$0xff]
        %v681 = vld [vmem:[%s190 + $0x1d0] sm:$0xff]
        %v682 = vld [vmem:[%s190 + $0x1d8] sm:$0xff]
        %v683 = vld [vmem:[%s190 + $0x1e0] sm:$0xff]
        %v684 = vld [vmem:[%s190 + $0x1e8] sm:$0xff]
        %v685 = vld [vmem:[%s190 + $0x1f0] sm:$0xff]
        %v686 = vld [vmem:[%s190 + $0x1f8] sm:$0xff]
        %v687 = vld [vmem:[%s190 + $0x200] sm:$0xff]
        %v688 = vld [vmem:[%s190 + $0x208] sm:$0xff]
        %v689 = vld [vmem:[%s190 + $0x210] sm:$0xff]
        %v690 = vld [vmem:[%s190 + $0x218] sm:$0xff]
        %v691 = vld [vmem:[%s190 + $0x220] sm:$0xff]
        %v692 = vld [vmem:[%s190 + $0x228] sm:$0xff]
        %v693 = vld [vmem:[%s190 + $0x230] sm:$0xff]
        %v694 = vld [vmem:[%s190 + $0x238] sm:$0xff]
        %v695 = vld [vmem:[%s190 + $0x240] sm:$0xff]
        %v696 = vld [vmem:[%s190 + $0x248] sm:$0xff]
        %v697 = vld [vmem:[%s190 + $0x250] sm:$0xff]
        %v698 = vld [vmem:[%s190 + $0x258] sm:$0xff]
        %v699 = vld [vmem:[%s190 + $0x260] sm:$0xff]
        %v700 = vld [vmem:[%s190 + $0x268] sm:$0xff]
        %v701 = vld [vmem:[%s190 + $0x270] sm:$0xff]
        %v702 = vld [vmem:[%s190 + $0x278] sm:$0xff]
        %v703 = vld [vmem:[%s190 + $0x280] sm:$0xff]
        %v704 = vld [vmem:[%s190 + $0x288] sm:$0xff]
        %v705 = vld [vmem:[%s190 + $0x290] sm:$0xff]
        %v706 = vld [vmem:[%s190 + $0x298] sm:$0xff]
        %v707 = vld [vmem:[%s190 + $0x2a0] sm:$0xff]
        %v708 = vld [vmem:[%s190 + $0x2a8] sm:$0xff]
        %v709 = vld [vmem:[%s190 + $0x2b0] sm:$0xff]
        %v710 = vld [vmem:[%s190 + $0x2b8] sm:$0xff]
        %v711 = vld [vmem:[%s190 + $0x2c0] sm:$0xff]
        %v712 = vld [vmem:[%s190 + $0x2c8] sm:$0xff]
        %v713 = vld [vmem:[%s190 + $0x2d0] sm:$0xff]
        %v714 = vld [vmem:[%s190 + $0x2d8] sm:$0xff]
        %v715 = vld [vmem:[%s190 + $0x2e0] sm:$0xff]
        %v716 = vld [vmem:[%s190 + $0x2e8] sm:$0xff]
        %v717 = vld [vmem:[%s190 + $0x2f0] sm:$0xff]
        %v718 = vld [vmem:[%s190 + $0x2f8] sm:$0xff]
        %v719 = vld [vmem:[%s190 + $0x300] sm:$0xff]
        %v720 = vld [vmem:[%s190 + $0x308] sm:$0xff]
        %v721 = vld [vmem:[%s190 + $0x310] sm:$0xff]
        %v722 = vld [vmem:[%s190 + $0x318] sm:$0xff]
        %v723 = vld [vmem:[%s190 + $0x320] sm:$0xff]
        %v724 = vld [vmem:[%s190 + $0x328] sm:$0xff]
        %v725 = vld [vmem:[%s190 + $0x330] sm:$0xff]
        %v726 = vld [vmem:[%s190 + $0x338] sm:$0xff]
        %v727 = vld [vmem:[%s190 + $0x340] sm:$0xff]
        %v728 = vld [vmem:[%s190 + $0x348] sm:$0xff]
        %v729 = vld [vmem:[%s190 + $0x350] sm:$0xff]
        %v730 = vld [vmem:[%s190 + $0x358] sm:$0xff]
        %v731 = vld [vmem:[%s190 + $0x360] sm:$0xff]
        %v732 = vld [vmem:[%s190 + $0x368] sm:$0xff]
        %v733 = vld [vmem:[%s190 + $0x370] sm:$0xff]
        %v734 = vld [vmem:[%s190 + $0x378] sm:$0xff]
        %v735 = vld [vmem:[%s190 + $0x380] sm:$0xff]
        %v736 = vld [vmem:[%s190 + $0x388] sm:$0xff]
        %v737 = vld [vmem:[%s190 + $0x390] sm:$0xff]
        %v738 = vld [vmem:[%s190 + $0x398] sm:$0xff]
        %v739 = vld [vmem:[%s190 + $0x3a0] sm:$0xff]
        %v740 = vld [vmem:[%s190 + $0x3a8] sm:$0xff]
        %v741 = vld [vmem:[%s190 + $0x3b0] sm:$0xff]
        %v742 = vld [vmem:[%s190 + $0x3b8] sm:$0xff]
        %v743 = vld [vmem:[%s190 + $0x3c0] sm:$0xff]
        %v744 = vld [vmem:[%s190 + $0x3c8] sm:$0xff]
        %v745 = vld [vmem:[%s190 + $0x3d0] sm:$0xff]
        %v746 = vld [vmem:[%s190 + $0x3d8] sm:$0xff]
        %v747 = vld [vmem:[%s190 + $0x3e0] sm:$0xff]
        %v748 = vld [vmem:[%s190 + $0x3e8] sm:$0xff]
        %v749 = vld [vmem:[%s190 + $0x3f0] sm:$0xff]
        %v750 = vld [vmem:[%s190 + $0x3f8] sm:$0xff]
        %v751 = vsel %vm495, 1, 0
        %v752 = vsel %vm496, 1, 0
        %v753 = vsel %vm497, 1, 0
        %v754 = vsel %vm498, 1, 0
        %v755 = vsel %vm499, 1, 0
        %v756 = vsel %vm500, 1, 0
        %v757 = vsel %vm501, 1, 0
        %v758 = vsel %vm502, 1, 0
        %v759 = vsel %vm503, 1, 0
        %v760 = vsel %vm504, 1, 0
        %v761 = vsel %vm505, 1, 0
        %v762 = vsel %vm506, 1, 0
        %v763 = vsel %vm507, 1, 0
        %v764 = vsel %vm508, 1, 0
        %v765 = vsel %vm509, 1, 0
        %v766 = vsel %vm510, 1, 0
        %v767 = vsel %vm511, 1, 0
        %v768 = vsel %vm512, 1, 0
        %v769 = vsel %vm513, 1, 0
        %v770 = vsel %vm514, 1, 0
        %v771 = vsel %vm515, 1, 0
        %v772 = vsel %vm516, 1, 0
        %v773 = vsel %vm517, 1, 0
        %v774 = vsel %vm518, 1, 0
        %v775 = vsel %vm519, 1, 0
        %v776 = vsel %vm520, 1, 0
        %v777 = vsel %vm521, 1, 0
        %v778 = vsel %vm522, 1, 0
        %v779 = vsel %vm523, 1, 0
        %v780 = vsel %vm524, 1, 0
        %v781 = vsel %vm525, 1, 0
        %v782 = vsel %vm526, 1, 0
        %v783 = vsel %vm527, 1, 0
        %v784 = vsel %vm528, 1, 0
        %v785 = vsel %vm529, 1, 0
        %v786 = vsel %vm530, 1, 0
        %v787 = vsel %vm531, 1, 0
        %v788 = vsel %vm532, 1, 0
        %v789 = vsel %vm533, 1, 0
        %v790 = vsel %vm534, 1, 0
        %v791 = vsel %vm535, 1, 0
        %v792 = vsel %vm536, 1, 0
        %v793 = vsel %vm537, 1, 0
        %v794 = vsel %vm538, 1, 0
        %v795 = vsel %vm539, 1, 0
        %v796 = vsel %vm540, 1, 0
        %v797 = vsel %vm541, 1, 0
        %v798 = vsel %vm542, 1, 0
        %v799 = vsel %vm543, 1, 0
        %v800 = vsel %vm544, 1, 0
        %v801 = vsel %vm545, 1, 0
        %v802 = vsel %vm546, 1, 0
        %v803 = vsel %vm547, 1, 0
        %v804 = vsel %vm548, 1, 0
        %v805 = vsel %vm549, 1, 0
        %v806 = vsel %vm550, 1, 0
        %v807 = vsel %vm551, 1, 0
        %v808 = vsel %vm552, 1, 0
        %v809 = vsel %vm553, 1, 0
        %v810 = vsel %vm554, 1, 0
        %v811 = vsel %vm555, 1, 0
        %v812 = vsel %vm556, 1, 0
        %v813 = vsel %vm557, 1, 0
        %v814 = vsel %vm558, 1, 0
        %v815 = vsel %vm559, 1, 0
        %v816 = vsel %vm560, 1, 0
        %v817 = vsel %vm561, 1, 0
        %v818 = vsel %vm562, 1, 0
        %v819 = vsel %vm563, 1, 0
        %v820 = vsel %vm564, 1, 0
        %v821 = vsel %vm565, 1, 0
        %v822 = vsel %vm566, 1, 0
        %v823 = vsel %vm567, 1, 0
        %v824 = vsel %vm568, 1, 0
        %v825 = vsel %vm569, 1, 0
        %v826 = vsel %vm570, 1, 0
        %v827 = vsel %vm571, 1, 0
        %v828 = vsel %vm572, 1, 0
        %v829 = vsel %vm573, 1, 0
        %v830 = vsel %vm574, 1, 0
        %v831 = vsel %vm575, 1, 0
        %v832 = vsel %vm576, 1, 0
        %v833 = vsel %vm577, 1, 0
        %v834 = vsel %vm578, 1, 0
        %v835 = vsel %vm579, 1, 0
        %v836 = vsel %vm580, 1, 0
        %v837 = vsel %vm581, 1, 0
        %v838 = vsel %vm582, 1, 0
        %v839 = vsel %vm583, 1, 0
        %v840 = vsel %vm584, 1, 0
        %v841 = vsel %vm585, 1, 0
        %v842 = vsel %vm586, 1, 0
        %v843 = vsel %vm587, 1, 0
        %v844 = vsel %vm588, 1, 0
        %v845 = vsel %vm589, 1, 0
        %v846 = vsel %vm590, 1, 0
        %v847 = vsel %vm591, 1, 0
        %v848 = vsel %vm592, 1, 0
        %v849 = vsel %vm593, 1, 0
        %v850 = vsel %vm594, 1, 0
        %v851 = vsel %vm595, 1, 0
        %v852 = vsel %vm596, 1, 0
        %v853 = vsel %vm597, 1, 0
        %v854 = vsel %vm598, 1, 0
        %v855 = vsel %vm599, 1, 0
        %v856 = vsel %vm600, 1, 0
        %v857 = vsel %vm601, 1, 0
        %v858 = vsel %vm602, 1, 0
        %v859 = vsel %vm603, 1, 0
        %v860 = vsel %vm604, 1, 0
        %v861 = vsel %vm605, 1, 0
        %v862 = vsel %vm606, 1, 0
        %v863 = vsel %vm607, 1, 0
        %v864 = vsel %vm608, 1, 0
        %v865 = vsel %vm609, 1, 0
        %v866 = vsel %vm610, 1, 0
        %v867 = vsel %vm611, 1, 0
        %v868 = vsel %vm612, 1, 0
        %v869 = vsel %vm613, 1, 0
        %v870 = vsel %vm614, 1, 0
        %v871 = vsel %vm615, 1, 0
        %v872 = vsel %vm616, 1, 0
        %v873 = vsel %vm617, 1, 0
        %v874 = vsel %vm618, 1, 0
        %v875 = vsel %vm619, 1, 0
        %v876 = vsel %vm620, 1, 0
        %v877 = vsel %vm621, 1, 0
        %v878 = vsel %vm622, 1, 0
        %vm879 = vcmp.eq.s32.totalorder %v751, 1
        %vm880 = vcmp.eq.s32.totalorder %v752, 1
        %vm881 = vcmp.eq.s32.totalorder %v753, 1
        %vm882 = vcmp.eq.s32.totalorder %v754, 1
        %vm883 = vcmp.eq.s32.totalorder %v755, 1
        %vm884 = vcmp.eq.s32.totalorder %v756, 1
        %vm885 = vcmp.eq.s32.totalorder %v757, 1
        %vm886 = vcmp.eq.s32.totalorder %v758, 1
        %vm887 = vcmp.eq.s32.totalorder %v759, 1
        %vm888 = vcmp.eq.s32.totalorder %v760, 1
        %vm889 = vcmp.eq.s32.totalorder %v761, 1
        %vm890 = vcmp.eq.s32.totalorder %v762, 1
        %vm891 = vcmp.eq.s32.totalorder %v763, 1
        %vm892 = vcmp.eq.s32.totalorder %v764, 1
        %vm893 = vcmp.eq.s32.totalorder %v765, 1
        %vm894 = vcmp.eq.s32.totalorder %v766, 1
        %vm895 = vcmp.eq.s32.totalorder %v767, 1
        %vm896 = vcmp.eq.s32.totalorder %v768, 1
        %vm897 = vcmp.eq.s32.totalorder %v769, 1
        %vm898 = vcmp.eq.s32.totalorder %v770, 1
        %vm899 = vcmp.eq.s32.totalorder %v771, 1
        %vm900 = vcmp.eq.s32.totalorder %v772, 1
        %vm901 = vcmp.eq.s32.totalorder %v773, 1
        %vm902 = vcmp.eq.s32.totalorder %v774, 1
        %vm903 = vcmp.eq.s32.totalorder %v775, 1
        %vm904 = vcmp.eq.s32.totalorder %v776, 1
        %vm905 = vcmp.eq.s32.totalorder %v777, 1
        %vm906 = vcmp.eq.s32.totalorder %v778, 1
        %vm907 = vcmp.eq.s32.totalorder %v779, 1
        %vm908 = vcmp.eq.s32.totalorder %v780, 1
        %vm909 = vcmp.eq.s32.totalorder %v781, 1
        %vm910 = vcmp.eq.s32.totalorder %v782, 1
        %vm911 = vcmp.eq.s32.totalorder %v783, 1
        %vm912 = vcmp.eq.s32.totalorder %v784, 1
        %vm913 = vcmp.eq.s32.totalorder %v785, 1
        %vm914 = vcmp.eq.s32.totalorder %v786, 1
        %vm915 = vcmp.eq.s32.totalorder %v787, 1
        %vm916 = vcmp.eq.s32.totalorder %v788, 1
        %vm917 = vcmp.eq.s32.totalorder %v789, 1
        %vm918 = vcmp.eq.s32.totalorder %v790, 1
        %vm919 = vcmp.eq.s32.totalorder %v791, 1
        %vm920 = vcmp.eq.s32.totalorder %v792, 1
        %vm921 = vcmp.eq.s32.totalorder %v793, 1
        %vm922 = vcmp.eq.s32.totalorder %v794, 1
        %vm923 = vcmp.eq.s32.totalorder %v795, 1
        %vm924 = vcmp.eq.s32.totalorder %v796, 1
        %vm925 = vcmp.eq.s32.totalorder %v797, 1
        %vm926 = vcmp.eq.s32.totalorder %v798, 1
        %vm927 = vcmp.eq.s32.totalorder %v799, 1
        %vm928 = vcmp.eq.s32.totalorder %v800, 1
        %vm929 = vcmp.eq.s32.totalorder %v801, 1
        %vm930 = vcmp.eq.s32.totalorder %v802, 1
        %vm931 = vcmp.eq.s32.totalorder %v803, 1
        %vm932 = vcmp.eq.s32.totalorder %v804, 1
        %vm933 = vcmp.eq.s32.totalorder %v805, 1
        %vm934 = vcmp.eq.s32.totalorder %v806, 1
        %vm935 = vcmp.eq.s32.totalorder %v807, 1
        %vm936 = vcmp.eq.s32.totalorder %v808, 1
        %vm937 = vcmp.eq.s32.totalorder %v809, 1
        %vm938 = vcmp.eq.s32.totalorder %v810, 1
        %vm939 = vcmp.eq.s32.totalorder %v811, 1
        %vm940 = vcmp.eq.s32.totalorder %v812, 1
        %vm941 = vcmp.eq.s32.totalorder %v813, 1
        %vm942 = vcmp.eq.s32.totalorder %v814, 1
        %vm943 = vcmp.eq.s32.totalorder %v815, 1
        %vm944 = vcmp.eq.s32.totalorder %v816, 1
        %vm945 = vcmp.eq.s32.totalorder %v817, 1
        %vm946 = vcmp.eq.s32.totalorder %v818, 1
        %vm947 = vcmp.eq.s32.totalorder %v819, 1
        %vm948 = vcmp.eq.s32.totalorder %v820, 1
        %vm949 = vcmp.eq.s32.totalorder %v821, 1
        %vm950 = vcmp.eq.s32.totalorder %v822, 1
        %vm951 = vcmp.eq.s32.totalorder %v823, 1
        %vm952 = vcmp.eq.s32.totalorder %v824, 1
        %vm953 = vcmp.eq.s32.totalorder %v825, 1
        %vm954 = vcmp.eq.s32.totalorder %v826, 1
        %vm955 = vcmp.eq.s32.totalorder %v827, 1
        %vm956 = vcmp.eq.s32.totalorder %v828, 1
        %vm957 = vcmp.eq.s32.totalorder %v829, 1
        %vm958 = vcmp.eq.s32.totalorder %v830, 1
        %vm959 = vcmp.eq.s32.totalorder %v831, 1
        %vm960 = vcmp.eq.s32.totalorder %v832, 1
        %vm961 = vcmp.eq.s32.totalorder %v833, 1
        %vm962 = vcmp.eq.s32.totalorder %v834, 1
        %vm963 = vcmp.eq.s32.totalorder %v835, 1
        %vm964 = vcmp.eq.s32.totalorder %v836, 1
        %vm965 = vcmp.eq.s32.totalorder %v837, 1
        %vm966 = vcmp.eq.s32.totalorder %v838, 1
        %vm967 = vcmp.eq.s32.totalorder %v839, 1
        %vm968 = vcmp.eq.s32.totalorder %v840, 1
        %vm969 = vcmp.eq.s32.totalorder %v841, 1
        %vm970 = vcmp.eq.s32.totalorder %v842, 1
        %vm971 = vcmp.eq.s32.totalorder %v843, 1
        %vm972 = vcmp.eq.s32.totalorder %v844, 1
        %vm973 = vcmp.eq.s32.totalorder %v845, 1
        %vm974 = vcmp.eq.s32.totalorder %v846, 1
        %vm975 = vcmp.eq.s32.totalorder %v847, 1
        %vm976 = vcmp.eq.s32.totalorder %v848, 1
        %vm977 = vcmp.eq.s32.totalorder %v849, 1
        %vm978 = vcmp.eq.s32.totalorder %v850, 1
        %vm979 = vcmp.eq.s32.totalorder %v851, 1
        %vm980 = vcmp.eq.s32.totalorder %v852, 1
        %vm981 = vcmp.eq.s32.totalorder %v853, 1
        %vm982 = vcmp.eq.s32.totalorder %v854, 1
        %vm983 = vcmp.eq.s32.totalorder %v855, 1
        %vm984 = vcmp.eq.s32.totalorder %v856, 1
        %vm985 = vcmp.eq.s32.totalorder %v857, 1
        %vm986 = vcmp.eq.s32.totalorder %v858, 1
        %vm987 = vcmp.eq.s32.totalorder %v859, 1
        %vm988 = vcmp.eq.s32.totalorder %v860, 1
        %vm989 = vcmp.eq.s32.totalorder %v861, 1
        %vm990 = vcmp.eq.s32.totalorder %v862, 1
        %vm991 = vcmp.eq.s32.totalorder %v863, 1
        %vm992 = vcmp.eq.s32.totalorder %v864, 1
        %vm993 = vcmp.eq.s32.totalorder %v865, 1
        %vm994 = vcmp.eq.s32.totalorder %v866, 1
        %vm995 = vcmp.eq.s32.totalorder %v867, 1
        %vm996 = vcmp.eq.s32.totalorder %v868, 1
        %vm997 = vcmp.eq.s32.totalorder %v869, 1
        %vm998 = vcmp.eq.s32.totalorder %v870, 1
        %vm999 = vcmp.eq.s32.totalorder %v871, 1
        %vm1000 = vcmp.eq.s32.totalorder %v872, 1
        %vm1001 = vcmp.eq.s32.totalorder %v873, 1
        %vm1002 = vcmp.eq.s32.totalorder %v874, 1
        %vm1003 = vcmp.eq.s32.totalorder %v875, 1
        %vm1004 = vcmp.eq.s32.totalorder %v876, 1
        %vm1005 = vcmp.eq.s32.totalorder %v877, 1
        %vm1006 = vcmp.eq.s32.totalorder %v878, 1
        %v1007 = vsel %vm879, %v623, 0.0
        %v1008 = vsel %vm880, %v624, 0.0
        %v1009 = vsel %vm881, %v625, 0.0
        %v1010 = vsel %vm882, %v626, 0.0
        %v1011 = vsel %vm883, %v627, 0.0
        %v1012 = vsel %vm884, %v628, 0.0
        %v1013 = vsel %vm885, %v629, 0.0
        %v1014 = vsel %vm886, %v630, 0.0
        %v1015 = vsel %vm887, %v631, 0.0
        %v1016 = vsel %vm888, %v632, 0.0
        %v1017 = vsel %vm889, %v633, 0.0
        %v1018 = vsel %vm890, %v634, 0.0
        %v1019 = vsel %vm891, %v635, 0.0
        %v1020 = vsel %vm892, %v636, 0.0
        %v1021 = vsel %vm893, %v637, 0.0
        %v1022 = vsel %vm894, %v638, 0.0
        %v1023 = vsel %vm895, %v639, 0.0
        %v1024 = vsel %vm896, %v640, 0.0
        %v1025 = vsel %vm897, %v641, 0.0
        %v1026 = vsel %vm898, %v642, 0.0
        %v1027 = vsel %vm899, %v643, 0.0
        %v1028 = vsel %vm900, %v644, 0.0
        %v1029 = vsel %vm901, %v645, 0.0
        %v1030 = vsel %vm902, %v646, 0.0
        %v1031 = vsel %vm903, %v647, 0.0
        %v1032 = vsel %vm904, %v648, 0.0
        %v1033 = vsel %vm905, %v649, 0.0
        %v1034 = vsel %vm906, %v650, 0.0
        %v1035 = vsel %vm907, %v651, 0.0
        %v1036 = vsel %vm908, %v652, 0.0
        %v1037 = vsel %vm909, %v653, 0.0
        %v1038 = vsel %vm910, %v654, 0.0
        %v1039 = vsel %vm911, %v655, 0.0
        %v1040 = vsel %vm912, %v656, 0.0
        %v1041 = vsel %vm913, %v657, 0.0
        %v1042 = vsel %vm914, %v658, 0.0
        %v1043 = vsel %vm915, %v659, 0.0
        %v1044 = vsel %vm916, %v660, 0.0
        %v1045 = vsel %vm917, %v661, 0.0
        %v1046 = vsel %vm918, %v662, 0.0
        %v1047 = vsel %vm919, %v663, 0.0
        %v1048 = vsel %vm920, %v664, 0.0
        %v1049 = vsel %vm921, %v665, 0.0
        %v1050 = vsel %vm922, %v666, 0.0
        %v1051 = vsel %vm923, %v667, 0.0
        %v1052 = vsel %vm924, %v668, 0.0
        %v1053 = vsel %vm925, %v669, 0.0
        %v1054 = vsel %vm926, %v670, 0.0
        %v1055 = vsel %vm927, %v671, 0.0
        %v1056 = vsel %vm928, %v672, 0.0
        %v1057 = vsel %vm929, %v673, 0.0
        %v1058 = vsel %vm930, %v674, 0.0
        %v1059 = vsel %vm931, %v675, 0.0
        %v1060 = vsel %vm932, %v676, 0.0
        %v1061 = vsel %vm933, %v677, 0.0
        %v1062 = vsel %vm934, %v678, 0.0
        %v1063 = vsel %vm935, %v679, 0.0
        %v1064 = vsel %vm936, %v680, 0.0
        %v1065 = vsel %vm937, %v681, 0.0
        %v1066 = vsel %vm938, %v682, 0.0
        %v1067 = vsel %vm939, %v683, 0.0
        %v1068 = vsel %vm940, %v684, 0.0
        %v1069 = vsel %vm941, %v685, 0.0
        %v1070 = vsel %vm942, %v686, 0.0
        %v1071 = vsel %vm943, %v687, 0.0
        %v1072 = vsel %vm944, %v688, 0.0
        %v1073 = vsel %vm945, %v689, 0.0
        %v1074 = vsel %vm946, %v690, 0.0
        %v1075 = vsel %vm947, %v691, 0.0
        %v1076 = vsel %vm948, %v692, 0.0
        %v1077 = vsel %vm949, %v693, 0.0
        %v1078 = vsel %vm950, %v694, 0.0
        %v1079 = vsel %vm951, %v695, 0.0
        %v1080 = vsel %vm952, %v696, 0.0
        %v1081 = vsel %vm953, %v697, 0.0
        %v1082 = vsel %vm954, %v698, 0.0
        %v1083 = vsel %vm955, %v699, 0.0
        %v1084 = vsel %vm956, %v700, 0.0
        %v1085 = vsel %vm957, %v701, 0.0
        %v1086 = vsel %vm958, %v702, 0.0
        %v1087 = vsel %vm959, %v703, 0.0
        %v1088 = vsel %vm960, %v704, 0.0
        %v1089 = vsel %vm961, %v705, 0.0
        %v1090 = vsel %vm962, %v706, 0.0
        %v1091 = vsel %vm963, %v707, 0.0
        %v1092 = vsel %vm964, %v708, 0.0
        %v1093 = vsel %vm965, %v709, 0.0
        %v1094 = vsel %vm966, %v710, 0.0
        %v1095 = vsel %vm967, %v711, 0.0
        %v1096 = vsel %vm968, %v712, 0.0
        %v1097 = vsel %vm969, %v713, 0.0
        %v1098 = vsel %vm970, %v714, 0.0
        %v1099 = vsel %vm971, %v715, 0.0
        %v1100 = vsel %vm972, %v716, 0.0
        %v1101 = vsel %vm973, %v717, 0.0
        %v1102 = vsel %vm974, %v718, 0.0
        %v1103 = vsel %vm975, %v719, 0.0
        %v1104 = vsel %vm976, %v720, 0.0
        %v1105 = vsel %vm977, %v721, 0.0
        %v1106 = vsel %vm978, %v722, 0.0
        %v1107 = vsel %vm979, %v723, 0.0
        %v1108 = vsel %vm980, %v724, 0.0
        %v1109 = vsel %vm981, %v725, 0.0
        %v1110 = vsel %vm982, %v726, 0.0
        %v1111 = vsel %vm983, %v727, 0.0
        %v1112 = vsel %vm984, %v728, 0.0
        %v1113 = vsel %vm985, %v729, 0.0
        %v1114 = vsel %vm986, %v730, 0.0
        %v1115 = vsel %vm987, %v731, 0.0
        %v1116 = vsel %vm988, %v732, 0.0
        %v1117 = vsel %vm989, %v733, 0.0
        %v1118 = vsel %vm990, %v734, 0.0
        %v1119 = vsel %vm991, %v735, 0.0
        %v1120 = vsel %vm992, %v736, 0.0
        %v1121 = vsel %vm993, %v737, 0.0
        %v1122 = vsel %vm994, %v738, 0.0
        %v1123 = vsel %vm995, %v739, 0.0
        %v1124 = vsel %vm996, %v740, 0.0
        %v1125 = vsel %vm997, %v741, 0.0
        %v1126 = vsel %vm998, %v742, 0.0
        %v1127 = vsel %vm999, %v743, 0.0
        %v1128 = vsel %vm1000, %v744, 0.0
        %v1129 = vsel %vm1001, %v745, 0.0
        %v1130 = vsel %vm1002, %v746, 0.0
        %v1131 = vsel %vm1003, %v747, 0.0
        %v1132 = vsel %vm1004, %v748, 0.0
        %v1133 = vsel %vm1005, %v749, 0.0
        %v1134 = vsel %vm1006, %v750, 0.0
        %v1135 = vld [vmem:[%s200] sm:$0xff]
        %v1136 = vperm.slane %v1135, 0
        %v1137 = vperm.slane %v1135, 1
        %v1138 = vperm.slane %v1135, 2
        %v1139 = vperm.slane %v1135, 3
        %v1140 = vperm.slane %v1135, 4
        %v1141 = vperm.slane %v1135, 5
        %v1142 = vperm.slane %v1135, 6
        %v1143 = vperm.slane %v1135, 7
        %vm1144 = vcmp.eq.s32.totalorder %v237, %v1136
        %vm1145 = vcmp.eq.s32.totalorder %v237, %v1137
        %vm1146 = vcmp.eq.s32.totalorder %v237, %v1138
        %vm1147 = vcmp.eq.s32.totalorder %v237, %v1139
        %vm1148 = vcmp.eq.s32.totalorder %v237, %v1140
        %vm1149 = vcmp.eq.s32.totalorder %v237, %v1141
        %vm1150 = vcmp.eq.s32.totalorder %v237, %v1142
        %vm1151 = vcmp.eq.s32.totalorder %v237, %v1143
        %v1152 = vsel %vm1144, 1, 0
        %v1153 = vsel %vm1145, 1, 0
        %v1154 = vsel %vm1146, 1, 0
        %v1155 = vsel %vm1147, 1, 0
        %v1156 = vsel %vm1148, 1, 0
        %v1157 = vsel %vm1149, 1, 0
        %v1158 = vsel %vm1150, 1, 0
        %v1159 = vsel %vm1151, 1, 0
        %v1160 = vcvt.s32.f32 %v1152
        %v1161 = vcvt.s32.f32 %v1153
        %v1162 = vcvt.s32.f32 %v1154
        %v1163 = vcvt.s32.f32 %v1155
        %v1164 = vcvt.s32.f32 %v1156
        %v1165 = vcvt.s32.f32 %v1157
        %v1166 = vcvt.s32.f32 %v1158
        %v1167 = vcvt.s32.f32 %v1159
        %v1168 = vld [vmem:[#allocation7] sm:$0xff]
        %1169 = vmatpush.msra.mxu0 %v1022
        %1170 = vmatpush.msra.mxu0 %v1021
        %1171 = vmatpush.msra.mxu0 %v1020
        %1172 = vmatpush.msra.mxu0 %v1019
        %1173 = vmatpush.msra.mxu0 %v1018
        %1174 = vmatpush.msra.mxu0 %v1017
        %1175 = vmatpush.msra.mxu0 %v1016
        %1176 = vmatpush.msra.mxu0 %v1015
        %1177 = vmatpush.msra.mxu0 %v1014
        %1178 = vmatpush.msra.mxu0 %v1013
        %1179 = vmatpush.msra.mxu0 %v1012
        %1180 = vmatpush.msra.mxu0 %v1011
        %1181 = vmatpush.msra.mxu0 %v1010
        %1182 = vmatpush.msra.mxu0 %v1009
        %1183 = vmatpush.msra.mxu0 %v1008
        %1184 = vmatpush.msra.mxu0 %v1007
        %1185 = vmatmul.f32.gmra.mxu0 %v1160
        %v1186 = vpop.f32.mrf.mxu0
        %v1187 = vadd.f32 0.0, %v1186
        %1188 = vdwg.mxu0
        %1189 = vmatpush.msra.mxu0 %v1038
        %1190 = vmatpush.msra.mxu0 %v1037
        %1191 = vmatpush.msra.mxu0 %v1036
        %1192 = vmatpush.msra.mxu0 %v1035
        %1193 = vmatpush.msra.mxu0 %v1034
        %1194 = vmatpush.msra.mxu0 %v1033
        %1195 = vmatpush.msra.mxu0 %v1032
        %1196 = vmatpush.msra.mxu0 %v1031
        %1197 = vmatpush.msra.mxu0 %v1030
        %1198 = vmatpush.msra.mxu0 %v1029
        %1199 = vmatpush.msra.mxu0 %v1028
        %1200 = vmatpush.msra.mxu0 %v1027
        %1201 = vmatpush.msra.mxu0 %v1026
        %1202 = vmatpush.msra.mxu0 %v1025
        %1203 = vmatpush.msra.mxu0 %v1024
        %1204 = vmatpush.msra.mxu0 %v1023
        %1205 = vmatmul.f32.gmra.mxu0 %v1161
        %v1206 = vpop.f32.mrf.mxu0
        %v1207 = vadd.f32 %v1187, %v1206
        %1208 = vdwg.mxu0
        %1209 = vmatpush.msra.mxu0 %v1054
        %1210 = vmatpush.msra.mxu0 %v1053
        %1211 = vmatpush.msra.mxu0 %v1052
        %1212 = vmatpush.msra.mxu0 %v1051
        %1213 = vmatpush.msra.mxu0 %v1050
        %1214 = vmatpush.msra.mxu0 %v1049
        %1215 = vmatpush.msra.mxu0 %v1048
        %1216 = vmatpush.msra.mxu0 %v1047
        %1217 = vmatpush.msra.mxu0 %v1046
        %1218 = vmatpush.msra.mxu0 %v1045
        %1219 = vmatpush.msra.mxu0 %v1044
        %1220 = vmatpush.msra.mxu0 %v1043
        %1221 = vmatpush.msra.mxu0 %v1042
        %1222 = vmatpush.msra.mxu0 %v1041
        %1223 = vmatpush.msra.mxu0 %v1040
        %1224 = vmatpush.msra.mxu0 %v1039
        %1225 = vmatmul.f32.gmra.mxu0 %v1162
        %v1226 = vpop.f32.mrf.mxu0
        %v1227 = vadd.f32 %v1207, %v1226
        %1228 = vdwg.mxu0
        %1229 = vmatpush.msra.mxu0 %v1070
        %1230 = vmatpush.msra.mxu0 %v1069
        %1231 = vmatpush.msra.mxu0 %v1068
        %1232 = vmatpush.msra.mxu0 %v1067
        %1233 = vmatpush.msra.mxu0 %v1066
        %1234 = vmatpush.msra.mxu0 %v1065
        %1235 = vmatpush.msra.mxu0 %v1064
        %1236 = vmatpush.msra.mxu0 %v1063
        %1237 = vmatpush.msra.mxu0 %v1062
        %1238 = vmatpush.msra.mxu0 %v1061
        %1239 = vmatpush.msra.mxu0 %v1060
        %1240 = vmatpush.msra.mxu0 %v1059
        %1241 = vmatpush.msra.mxu0 %v1058
        %1242 = vmatpush.msra.mxu0 %v1057
        %1243 = vmatpush.msra.mxu0 %v1056
        %1244 = vmatpush.msra.mxu0 %v1055
        %1245 = vmatmul.f32.gmra.mxu0 %v1163
        %v1246 = vpop.f32.mrf.mxu0
        %v1247 = vadd.f32 %v1227, %v1246
        %1248 = vdwg.mxu0
        %1249 = vmatpush.msra.mxu0 %v1086
        %1250 = vmatpush.msra.mxu0 %v1085
        %1251 = vmatpush.msra.mxu0 %v1084
        %1252 = vmatpush.msra.mxu0 %v1083
        %1253 = vmatpush.msra.mxu0 %v1082
        %1254 = vmatpush.msra.mxu0 %v1081
        %1255 = vmatpush.msra.mxu0 %v1080
        %1256 = vmatpush.msra.mxu0 %v1079
        %1257 = vmatpush.msra.mxu0 %v1078
        %1258 = vmatpush.msra.mxu0 %v1077
        %1259 = vmatpush.msra.mxu0 %v1076
        %1260 = vmatpush.msra.mxu0 %v1075
        %1261 = vmatpush.msra.mxu0 %v1074
        %1262 = vmatpush.msra.mxu0 %v1073
        %1263 = vmatpush.msra.mxu0 %v1072
        %1264 = vmatpush.msra.mxu0 %v1071
        %1265 = vmatmul.f32.gmra.mxu0 %v1164
        %v1266 = vpop.f32.mrf.mxu0
        %v1267 = vadd.f32 %v1247, %v1266
        %1268 = vdwg.mxu0
        %1269 = vmatpush.msra.mxu0 %v1102
        %1270 = vmatpush.msra.mxu0 %v1101
        %1271 = vmatpush.msra.mxu0 %v1100
        %1272 = vmatpush.msra.mxu0 %v1099
        %1273 = vmatpush.msra.mxu0 %v1098
        %1274 = vmatpush.msra.mxu0 %v1097
        %1275 = vmatpush.msra.mxu0 %v1096
        %1276 = vmatpush.msra.mxu0 %v1095
        %1277 = vmatpush.msra.mxu0 %v1094
        %1278 = vmatpush.msra.mxu0 %v1093
        %1279 = vmatpush.msra.mxu0 %v1092
        %1280 = vmatpush.msra.mxu0 %v1091
        %1281 = vmatpush.msra.mxu0 %v1090
        %1282 = vmatpush.msra.mxu0 %v1089
        %1283 = vmatpush.msra.mxu0 %v1088
        %1284 = vmatpush.msra.mxu0 %v1087
        %1285 = vmatmul.f32.gmra.mxu0 %v1165
        %v1286 = vpop.f32.mrf.mxu0
        %v1287 = vadd.f32 %v1267, %v1286
        %1288 = vdwg.mxu0
        %1289 = vmatpush.msra.mxu0 %v1118
        %1290 = vmatpush.msra.mxu0 %v1117
        %1291 = vmatpush.msra.mxu0 %v1116
        %1292 = vmatpush.msra.mxu0 %v1115
        %1293 = vmatpush.msra.mxu0 %v1114
        %1294 = vmatpush.msra.mxu0 %v1113
        %1295 = vmatpush.msra.mxu0 %v1112
        %1296 = vmatpush.msra.mxu0 %v1111
        %1297 = vmatpush.msra.mxu0 %v1110
        %1298 = vmatpush.msra.mxu0 %v1109
        %1299 = vmatpush.msra.mxu0 %v1108
        %1300 = vmatpush.msra.mxu0 %v1107
        %1301 = vmatpush.msra.mxu0 %v1106
        %1302 = vmatpush.msra.mxu0 %v1105
        %1303 = vmatpush.msra.mxu0 %v1104
        %1304 = vmatpush.msra.mxu0 %v1103
        %1305 = vmatmul.f32.gmra.mxu0 %v1166
        %v1306 = vpop.f32.mrf.mxu0
        %v1307 = vadd.f32 %v1287, %v1306
        %1308 = vdwg.mxu0
        %1309 = vmatpush.msra.mxu0 %v1134
        %1310 = vmatpush.msra.mxu0 %v1133
        %1311 = vmatpush.msra.mxu0 %v1132
        %1312 = vmatpush.msra.mxu0 %v1131
        %1313 = vmatpush.msra.mxu0 %v1130
        %1314 = vmatpush.msra.mxu0 %v1129
        %1315 = vmatpush.msra.mxu0 %v1128
        %1316 = vmatpush.msra.mxu0 %v1127
        %1317 = vmatpush.msra.mxu0 %v1126
        %1318 = vmatpush.msra.mxu0 %v1125
        %1319 = vmatpush.msra.mxu0 %v1124
        %1320 = vmatpush.msra.mxu0 %v1123
        %1321 = vmatpush.msra.mxu0 %v1122
        %1322 = vmatpush.msra.mxu0 %v1121
        %1323 = vmatpush.msra.mxu0 %v1120
        %1324 = vmatpush.msra.mxu0 %v1119
        %1325 = vmatmul.f32.gmra.mxu0 %v1167
        %v1326 = vpop.f32.mrf.mxu0
        %v1327 = vadd.f32 %v1307, %v1326
        %1328 = vdwg.mxu0
        %v1329 = vadd.f32 %v1168, %v1327
        %1330 = vst [vmem:[#allocation7] sm:$0xff] %v1329
        %v1331 = vld [vmem:[#allocation8] sm:$0xff]
        %v1332 = vmul.f32 %v1007, %v1007
        %v1333 = vmul.f32 %v1008, %v1008
        %v1334 = vmul.f32 %v1009, %v1009
        %v1335 = vmul.f32 %v1010, %v1010
        %v1336 = vmul.f32 %v1011, %v1011
        %v1337 = vmul.f32 %v1012, %v1012
        %v1338 = vmul.f32 %v1013, %v1013
        %v1339 = vmul.f32 %v1014, %v1014
        %v1340 = vmul.f32 %v1015, %v1015
        %v1341 = vmul.f32 %v1016, %v1016
        %v1342 = vmul.f32 %v1017, %v1017
        %v1343 = vmul.f32 %v1018, %v1018
        %v1344 = vmul.f32 %v1019, %v1019
        %v1345 = vmul.f32 %v1020, %v1020
        %v1346 = vmul.f32 %v1021, %v1021
        %v1347 = vmul.f32 %v1022, %v1022
        %v1348 = vmul.f32 %v1023, %v1023
        %v1349 = vmul.f32 %v1024, %v1024
        %v1350 = vmul.f32 %v1025, %v1025
        %v1351 = vmul.f32 %v1026, %v1026
        %v1352 = vmul.f32 %v1027, %v1027
        %v1353 = vmul.f32 %v1028, %v1028
        %v1354 = vmul.f32 %v1029, %v1029
        %v1355 = vmul.f32 %v1030, %v1030
        %v1356 = vmul.f32 %v1031, %v1031
        %v1357 = vmul.f32 %v1032, %v1032
        %v1358 = vmul.f32 %v1033, %v1033
        %v1359 = vmul.f32 %v1034, %v1034
        %v1360 = vmul.f32 %v1035, %v1035
        %v1361 = vmul.f32 %v1036, %v1036
        %v1362 = vmul.f32 %v1037, %v1037
        %v1363 = vmul.f32 %v1038, %v1038
        %v1364 = vmul.f32 %v1039, %v1039
        %v1365 = vmul.f32 %v1040, %v1040
        %v1366 = vmul.f32 %v1041, %v1041
        %v1367 = vmul.f32 %v1042, %v1042
        %v1368 = vmul.f32 %v1043, %v1043
        %v1369 = vmul.f32 %v1044, %v1044
        %v1370 = vmul.f32 %v1045, %v1045
        %v1371 = vmul.f32 %v1046, %v1046
        %v1372 = vmul.f32 %v1047, %v1047
        %v1373 = vmul.f32 %v1048, %v1048
        %v1374 = vmul.f32 %v1049, %v1049
        %v1375 = vmul.f32 %v1050, %v1050
        %v1376 = vmul.f32 %v1051, %v1051
        %v1377 = vmul.f32 %v1052, %v1052
        %v1378 = vmul.f32 %v1053, %v1053
        %v1379 = vmul.f32 %v1054, %v1054
        %v1380 = vmul.f32 %v1055, %v1055
        %v1381 = vmul.f32 %v1056, %v1056
        %v1382 = vmul.f32 %v1057, %v1057
        %v1383 = vmul.f32 %v1058, %v1058
        %v1384 = vmul.f32 %v1059, %v1059
        %v1385 = vmul.f32 %v1060, %v1060
        %v1386 = vmul.f32 %v1061, %v1061
        %v1387 = vmul.f32 %v1062, %v1062
        %v1388 = vmul.f32 %v1063, %v1063
        %v1389 = vmul.f32 %v1064, %v1064
        %v1390 = vmul.f32 %v1065, %v1065
        %v1391 = vmul.f32 %v1066, %v1066
        %v1392 = vmul.f32 %v1067, %v1067
        %v1393 = vmul.f32 %v1068, %v1068
        %v1394 = vmul.f32 %v1069, %v1069
        %v1395 = vmul.f32 %v1070, %v1070
        %v1396 = vmul.f32 %v1071, %v1071
        %v1397 = vmul.f32 %v1072, %v1072
        %v1398 = vmul.f32 %v1073, %v1073
        %v1399 = vmul.f32 %v1074, %v1074
        %v1400 = vmul.f32 %v1075, %v1075
        %v1401 = vmul.f32 %v1076, %v1076
        %v1402 = vmul.f32 %v1077, %v1077
        %v1403 = vmul.f32 %v1078, %v1078
        %v1404 = vmul.f32 %v1079, %v1079
        %v1405 = vmul.f32 %v1080, %v1080
        %v1406 = vmul.f32 %v1081, %v1081
        %v1407 = vmul.f32 %v1082, %v1082
        %v1408 = vmul.f32 %v1083, %v1083
        %v1409 = vmul.f32 %v1084, %v1084
        %v1410 = vmul.f32 %v1085, %v1085
        %v1411 = vmul.f32 %v1086, %v1086
        %v1412 = vmul.f32 %v1087, %v1087
        %v1413 = vmul.f32 %v1088, %v1088
        %v1414 = vmul.f32 %v1089, %v1089
        %v1415 = vmul.f32 %v1090, %v1090
        %v1416 = vmul.f32 %v1091, %v1091
        %v1417 = vmul.f32 %v1092, %v1092
        %v1418 = vmul.f32 %v1093, %v1093
        %v1419 = vmul.f32 %v1094, %v1094
        %v1420 = vmul.f32 %v1095, %v1095
        %v1421 = vmul.f32 %v1096, %v1096
        %v1422 = vmul.f32 %v1097, %v1097
        %v1423 = vmul.f32 %v1098, %v1098
        %v1424 = vmul.f32 %v1099, %v1099
        %v1425 = vmul.f32 %v1100, %v1100
        %v1426 = vmul.f32 %v1101, %v1101
        %v1427 = vmul.f32 %v1102, %v1102
        %v1428 = vmul.f32 %v1103, %v1103
        %v1429 = vmul.f32 %v1104, %v1104
        %v1430 = vmul.f32 %v1105, %v1105
        %v1431 = vmul.f32 %v1106, %v1106
        %v1432 = vmul.f32 %v1107, %v1107
        %v1433 = vmul.f32 %v1108, %v1108
        %v1434 = vmul.f32 %v1109, %v1109
        %v1435 = vmul.f32 %v1110, %v1110
        %v1436 = vmul.f32 %v1111, %v1111
        %v1437 = vmul.f32 %v1112, %v1112
        %v1438 = vmul.f32 %v1113, %v1113
        %v1439 = vmul.f32 %v1114, %v1114
        %v1440 = vmul.f32 %v1115, %v1115
        %v1441 = vmul.f32 %v1116, %v1116
        %v1442 = vmul.f32 %v1117, %v1117
        %v1443 = vmul.f32 %v1118, %v1118
        %v1444 = vmul.f32 %v1119, %v1119
        %v1445 = vmul.f32 %v1120, %v1120
        %v1446 = vmul.f32 %v1121, %v1121
        %v1447 = vmul.f32 %v1122, %v1122
        %v1448 = vmul.f32 %v1123, %v1123
        %v1449 = vmul.f32 %v1124, %v1124
        %v1450 = vmul.f32 %v1125, %v1125
        %v1451 = vmul.f32 %v1126, %v1126
        %v1452 = vmul.f32 %v1127, %v1127
        %v1453 = vmul.f32 %v1128, %v1128
        %v1454 = vmul.f32 %v1129, %v1129
        %v1455 = vmul.f32 %v1130, %v1130
        %v1456 = vmul.f32 %v1131, %v1131
        %v1457 = vmul.f32 %v1132, %v1132
        %v1458 = vmul.f32 %v1133, %v1133
        %v1459 = vmul.f32 %v1134, %v1134
        %1460 = vmatpush.msra.mxu0 %v1347
        %1461 = vmatpush.msra.mxu0 %v1346
        %1462 = vmatpush.msra.mxu0 %v1345
        %1463 = vmatpush.msra.mxu0 %v1344
        %1464 = vmatpush.msra.mxu0 %v1343
        %1465 = vmatpush.msra.mxu0 %v1342
        %1466 = vmatpush.msra.mxu0 %v1341
        %1467 = vmatpush.msra.mxu0 %v1340
        %1468 = vmatpush.msra.mxu0 %v1339
        %1469 = vmatpush.msra.mxu0 %v1338
        %1470 = vmatpush.msra.mxu0 %v1337
        %1471 = vmatpush.msra.mxu0 %v1336
        %1472 = vmatpush.msra.mxu0 %v1335
        %1473 = vmatpush.msra.mxu0 %v1334
        %1474 = vmatpush.msra.mxu0 %v1333
        %1475 = vmatpush.msra.mxu0 %v1332
        %1476 = vmatmul.f32.gmra.mxu0 %v1160
        %v1477 = vpop.f32.mrf.mxu0
        %v1478 = vadd.f32 0.0, %v1477
        %1479 = vdwg.mxu0
        %1480 = vmatpush.msra.mxu0 %v1363
        %1481 = vmatpush.msra.mxu0 %v1362
        %1482 = vmatpush.msra.mxu0 %v1361
        %1483 = vmatpush.msra.mxu0 %v1360
        %1484 = vmatpush.msra.mxu0 %v1359
        %1485 = vmatpush.msra.mxu0 %v1358
        %1486 = vmatpush.msra.mxu0 %v1357
        %1487 = vmatpush.msra.mxu0 %v1356
        %1488 = vmatpush.msra.mxu0 %v1355
        %1489 = vmatpush.msra.mxu0 %v1354
        %1490 = vmatpush.msra.mxu0 %v1353
        %1491 = vmatpush.msra.mxu0 %v1352
        %1492 = vmatpush.msra.mxu0 %v1351
        %1493 = vmatpush.msra.mxu0 %v1350
        %1494 = vmatpush.msra.mxu0 %v1349
        %1495 = vmatpush.msra.mxu0 %v1348
        %1496 = vmatmul.f32.gmra.mxu0 %v1161
        %v1497 = vpop.f32.mrf.mxu0
        %v1498 = vadd.f32 %v1478, %v1497
        %1499 = vdwg.mxu0
        %1500 = vmatpush.msra.mxu0 %v1379
        %1501 = vmatpush.msra.mxu0 %v1378
        %1502 = vmatpush.msra.mxu0 %v1377
        %1503 = vmatpush.msra.mxu0 %v1376
        %1504 = vmatpush.msra.mxu0 %v1375
        %1505 = vmatpush.msra.mxu0 %v1374
        %1506 = vmatpush.msra.mxu0 %v1373
        %1507 = vmatpush.msra.mxu0 %v1372
        %1508 = vmatpush.msra.mxu0 %v1371
        %1509 = vmatpush.msra.mxu0 %v1370
        %1510 = vmatpush.msra.mxu0 %v1369
        %1511 = vmatpush.msra.mxu0 %v1368
        %1512 = vmatpush.msra.mxu0 %v1367
        %1513 = vmatpush.msra.mxu0 %v1366
        %1514 = vmatpush.msra.mxu0 %v1365
        %1515 = vmatpush.msra.mxu0 %v1364
        %1516 = vmatmul.f32.gmra.mxu0 %v1162
        %v1517 = vpop.f32.mrf.mxu0
        %v1518 = vadd.f32 %v1498, %v1517
        %1519 = vdwg.mxu0
        %1520 = vmatpush.msra.mxu0 %v1395
        %1521 = vmatpush.msra.mxu0 %v1394
        %1522 = vmatpush.msra.mxu0 %v1393
        %1523 = vmatpush.msra.mxu0 %v1392
        %1524 = vmatpush.msra.mxu0 %v1391
        %1525 = vmatpush.msra.mxu0 %v1390
        %1526 = vmatpush.msra.mxu0 %v1389
        %1527 = vmatpush.msra.mxu0 %v1388
        %1528 = vmatpush.msra.mxu0 %v1387
        %1529 = vmatpush.msra.mxu0 %v1386
        %1530 = vmatpush.msra.mxu0 %v1385
        %1531 = vmatpush.msra.mxu0 %v1384
        %1532 = vmatpush.msra.mxu0 %v1383
        %1533 = vmatpush.msra.mxu0 %v1382
        %1534 = vmatpush.msra.mxu0 %v1381
        %1535 = vmatpush.msra.mxu0 %v1380
        %1536 = vmatmul.f32.gmra.mxu0 %v1163
        %v1537 = vpop.f32.mrf.mxu0
        %v1538 = vadd.f32 %v1518, %v1537
        %1539 = vdwg.mxu0
        %1540 = vmatpush.msra.mxu0 %v1411
        %1541 = vmatpush.msra.mxu0 %v1410
        %1542 = vmatpush.msra.mxu0 %v1409
        %1543 = vmatpush.msra.mxu0 %v1408
        %1544 = vmatpush.msra.mxu0 %v1407
        %1545 = vmatpush.msra.mxu0 %v1406
        %1546 = vmatpush.msra.mxu0 %v1405
        %1547 = vmatpush.msra.mxu0 %v1404
        %1548 = vmatpush.msra.mxu0 %v1403
        %1549 = vmatpush.msra.mxu0 %v1402
        %1550 = vmatpush.msra.mxu0 %v1401
        %1551 = vmatpush.msra.mxu0 %v1400
        %1552 = vmatpush.msra.mxu0 %v1399
        %1553 = vmatpush.msra.mxu0 %v1398
        %1554 = vmatpush.msra.mxu0 %v1397
        %1555 = vmatpush.msra.mxu0 %v1396
        %1556 = vmatmul.f32.gmra.mxu0 %v1164
        %v1557 = vpop.f32.mrf.mxu0
        %v1558 = vadd.f32 %v1538, %v1557
        %1559 = vdwg.mxu0
        %1560 = vmatpush.msra.mxu0 %v1427
        %1561 = vmatpush.msra.mxu0 %v1426
        %1562 = vmatpush.msra.mxu0 %v1425
        %1563 = vmatpush.msra.mxu0 %v1424
        %1564 = vmatpush.msra.mxu0 %v1423
        %1565 = vmatpush.msra.mxu0 %v1422
        %1566 = vmatpush.msra.mxu0 %v1421
        %1567 = vmatpush.msra.mxu0 %v1420
        %1568 = vmatpush.msra.mxu0 %v1419
        %1569 = vmatpush.msra.mxu0 %v1418
        %1570 = vmatpush.msra.mxu0 %v1417
        %1571 = vmatpush.msra.mxu0 %v1416
        %1572 = vmatpush.msra.mxu0 %v1415
        %1573 = vmatpush.msra.mxu0 %v1414
        %1574 = vmatpush.msra.mxu0 %v1413
        %1575 = vmatpush.msra.mxu0 %v1412
        %1576 = vmatmul.f32.gmra.mxu0 %v1165
        %v1577 = vpop.f32.mrf.mxu0
        %v1578 = vadd.f32 %v1558, %v1577
        %1579 = vdwg.mxu0
        %1580 = vmatpush.msra.mxu0 %v1443
        %1581 = vmatpush.msra.mxu0 %v1442
        %1582 = vmatpush.msra.mxu0 %v1441
        %1583 = vmatpush.msra.mxu0 %v1440
        %1584 = vmatpush.msra.mxu0 %v1439
        %1585 = vmatpush.msra.mxu0 %v1438
        %1586 = vmatpush.msra.mxu0 %v1437
        %1587 = vmatpush.msra.mxu0 %v1436
        %1588 = vmatpush.msra.mxu0 %v1435
        %1589 = vmatpush.msra.mxu0 %v1434
        %1590 = vmatpush.msra.mxu0 %v1433
        %1591 = vmatpush.msra.mxu0 %v1432
        %1592 = vmatpush.msra.mxu0 %v1431
        %1593 = vmatpush.msra.mxu0 %v1430
        %1594 = vmatpush.msra.mxu0 %v1429
        %1595 = vmatpush.msra.mxu0 %v1428
        %1596 = vmatmul.f32.gmra.mxu0 %v1166
        %v1597 = vpop.f32.mrf.mxu0
        %v1598 = vadd.f32 %v1578, %v1597
        %1599 = vdwg.mxu0
        %1600 = vmatpush.msra.mxu0 %v1459
        %1601 = vmatpush.msra.mxu0 %v1458
        %1602 = vmatpush.msra.mxu0 %v1457
        %1603 = vmatpush.msra.mxu0 %v1456
        %1604 = vmatpush.msra.mxu0 %v1455
        %1605 = vmatpush.msra.mxu0 %v1454
        %1606 = vmatpush.msra.mxu0 %v1453
        %1607 = vmatpush.msra.mxu0 %v1452
        %1608 = vmatpush.msra.mxu0 %v1451
        %1609 = vmatpush.msra.mxu0 %v1450
        %1610 = vmatpush.msra.mxu0 %v1449
        %1611 = vmatpush.msra.mxu0 %v1448
        %1612 = vmatpush.msra.mxu0 %v1447
        %1613 = vmatpush.msra.mxu0 %v1446
        %1614 = vmatpush.msra.mxu0 %v1445
        %1615 = vmatpush.msra.mxu0 %v1444
        %1616 = vmatmul.f32.gmra.mxu0 %v1167
        %v1617 = vpop.f32.mrf.mxu0
        %v1618 = vadd.f32 %v1598, %v1617
        %1619 = vdwg.mxu0
        %v1620 = vadd.f32 %v1331, %v1618
        %1621 = vst [vmem:[#allocation8] sm:$0xff] %v1620
        // Predicated region
        $region41: #{tpu_custom_call.1} parent=27 // pred_check
          %p1622 = pneg %p88
        $region42: #{tpu_custom_call.1} parent=27 // pred_check_branch
          %1624 = sbr.rel (%p1622) target = $region44
        $region43: #{tpu_custom_call.1} parent=27 // pred_region
          %1626 = vsyncadd [#allocation4], 0
          %s1628 = sshll.u32 [#allocation7], 4
          %s1629 = int_to_ptr.vmem [resolvable:$true] %s1628
          %s1630 = sshll.u32 %s2, 4
          %s1631 = int_to_ptr.hbm [resolvable:$true] %s1630
          %1633 = dma.vmem_to_hbm [thread:$0]  %s1629, 128, %s1631, [#allocation4]
        $region44: #{tpu_custom_call.1} parent=27 // pred_fallthru
          _
        // Predicated region
        $region45: #{tpu_custom_call.1} parent=27 // pred_check
          %p1634 = pneg %p109
        $region46: #{tpu_custom_call.1} parent=27 // pred_check_branch
          %1636 = sbr.rel (%p1634) target = $region48
        $region47: #{tpu_custom_call.1} parent=27 // pred_region
          %1638 = vsyncadd [#allocation9], 0
          %s1640 = sshll.u32 [#allocation8], 4
          %s1641 = int_to_ptr.vmem [resolvable:$true] %s1640
          %s1642 = sshll.u32 %s3, 4
          %s1643 = int_to_ptr.hbm [resolvable:$true] %s1642
          %1645 = dma.vmem_to_hbm [thread:$0]  %s1641, 128, %s1643, [#allocation9]
        $region48: #{tpu_custom_call.1} parent=27 // pred_fallthru
          _
        // Predicated region
        $region49: #{tpu_custom_call.1} parent=27 // pred_check
          %p1646 = pneg %p88
        $region50: #{tpu_custom_call.1} parent=27 // pred_check_branch
          %1648 = sbr.rel (%p1646) target = $region52
        $region51: #{tpu_custom_call.1} parent=27 // pred_region
          %1650 = dma.done [#allocation4], 128
        $region52: #{tpu_custom_call.1} parent=27 // pred_fallthru
          _
        // Predicated region
        $region53: #{tpu_custom_call.1} parent=27 // pred_check
          %p1651 = pneg %p109
        $region54: #{tpu_custom_call.1} parent=27 // pred_check_branch
          %1653 = sbr.rel (%p1651) target = $region56
        $region55: #{tpu_custom_call.1} parent=27 // pred_region
          %1655 = dma.done [#allocation9], 128
        $region56: #{tpu_custom_call.1} parent=27 // pred_fallthru
          _
      $region28: #{tpu_custom_call.1} parent=5 // pred_fallthru
        _
      %p1656 = scmp.le.s32.totalorder 2, %s18
      // Predicated region
      $region57: #{tpu_custom_call.1} parent=5 // pred_check
        %p1657 = pneg %p1656
      $region58: #{tpu_custom_call.1} parent=5 // pred_check_branch
        %1659 = sbr.rel (%p1657) target = $region60
      $region59: #{tpu_custom_call.1} parent=5 // pred_region
        %s1660 = ssub.s32 %s18, 2
      $region60: #{tpu_custom_call.1} parent=5 // pred_fallthru
        _
    $region6: #{tpu_custom_call.1} parent=1 // loop_footer
      %s22 = sadd.s32 1, %s18
    $region7: #{tpu_custom_call.1} parent=1 // loop_footer_branch
      %17 = sbr.rel target = $region3
    $region8: #{tpu_custom_call.1} parent=1 // loop_exit
      _
    %1661 = vsyncpa [#allocation3], 1
    %s1662 = scalar_lea.sflag [#allocation3], 1
    %1663 = vsyncpa %s1662, 1
    %1664 = vsyncpa [#allocation6], 1
    %s1665 = scalar_lea.sflag [#allocation6], 1
    %1666 = vsyncpa %s1665, 1
    %1667 = vsyncpa [#allocation4], 1
    %s1668 = scalar_lea.sflag [#allocation4], 1
    %1669 = vsyncpa %s1668, 1
    %1670 = vsyncpa [#allocation9], 1

</llo_original>
